<compile_context>
chip_gen: v7x
topology: tpu7x:2x2x1
jax: 0.10.0
libtpu: 0.0.40
codegen_flags: <defaults>
</compile_context>

<pallas_src>
import functools

import jax
import jax.numpy as jnp
from jax.experimental import pallas as pl
from jax.experimental.pallas import tpu as pltpu

D_IN, H1, H2, D_OUT = 784, 200, 100, 10
H1_PAD, H2_PAD = 256, 128  # lane-aligned hidden dims (zero-padded; exact through ReLU)


def mlp_kernel(x_ref, w1_ref, b1_ref, w2_ref, b2_ref, w3_ref, b3_ref, o_ref):
    # Layer 1: Linear(784 -> 256pad) + ReLU.  x arrives f32; cast to bf16 here (VPU,
    # hidden under the DMA) so HBM only sees one f32 read of x instead of cast+reread.
    x = x_ref[...].astype(jnp.bfloat16)
    h1 = jnp.dot(x, w1_ref[...], preferred_element_type=jnp.float32)
    h1 = jnp.maximum(h1 + b1_ref[...], 0.0)
    # Layer 2: Linear(256pad -> 128pad) + ReLU
    h2 = jnp.dot(h1.astype(jnp.bfloat16), w2_ref[...], preferred_element_type=jnp.float32)
    h2 = jnp.maximum(h2 + b2_ref[...], 0.0)
    # Layer 3: Linear(128pad -> 10)  (logits stay 10 lanes wide — no pre-softmax padding)
    logits = jnp.dot(h2.astype(jnp.bfloat16), w3_ref[...], preferred_element_type=jnp.float32)
    logits = logits + b3_ref[...]
    # Softmax(dim=1), numerically stable, exact divide (one divide per 10-wide row).
    m = jnp.max(logits, axis=-1, keepdims=True)
    e = jnp.exp(logits - m)
    o_ref[...] = e / jnp.sum(e, axis=-1, keepdims=True)


def _round_up(n, m):
    return ((n + m - 1) // m) * m


def _pad_to(a, shape):
    return jnp.pad(a, [(0, t - s) for s, t in zip(a.shape, shape)])


def prepare_params(w1, b1, w2, b2, w3, b3):
    """One-time weight prep: zero-pad hidden dims to lane multiples, cast MXU operands
    to bf16.  Call once; reuse the result for every forward call."""
    return (
        _pad_to(w1, (D_IN, H1_PAD)).astype(jnp.bfloat16),
        _pad_to(b1, (1, H1_PAD)).astype(jnp.float32),
        _pad_to(w2, (H1_PAD, H2_PAD)).astype(jnp.bfloat16),
        _pad_to(b2, (1, H2_PAD)).astype(jnp.float32),
        _pad_to(w3, (H2_PAD, D_OUT)).astype(jnp.bfloat16),
        b3.astype(jnp.float32),
    )


def _select_tile_b(B, target=1024):
    """Batch tile: large enough to amortize the ~0.35 us/step overhead, small enough to
    keep >= ~8 grid steps at large B (v7x megacore + double-buffered prefetch).  Small
    batches get a single 16-sublane-aligned tile (bf16 sublane packing on v5e)."""
    if B <= 256:
        return max(16, _round_up(B, 16))
    tile = min(target, _round_up(pl.cdiv(B, 8), 256))  # multiple of 256, >= ~8 steps
    return max(256, tile)


@functools.partial(jax.jit, static_argnames=("tile_b",))
def _mlp_pallas(x, w1p, b1p, w2p, b2p, w3p, b3p, tile_b):
    B = x.shape[0]
    grid = (pl.cdiv(B, tile_b),)

    flops = 2 * B * (D_IN * H1_PAD + H1_PAD * H2_PAD + H2_PAD * D_OUT)
    bytes_accessed = (
        x.size * 4                                    # f32 activations in (single read)
        + (w1p.size + w2p.size + w3p.size) * 2        # bf16 weights (VMEM-resident)
        + (b1p.size + b2p.size + b3p.size) * 4        # f32 biases
        + B * D_OUT * 4                               # f32 probabilities out
    )

    return pl.pallas_call(
        mlp_kernel,
        out_shape=jax.ShapeDtypeStruct((B, D_OUT), jnp.float32),
        grid=grid,
        in_specs=[
            pl.BlockSpec((tile_b, D_IN), lambda i: (i, 0)),   # x: one batch tile / step
            pl.BlockSpec((D_IN, H1_PAD), lambda i: (0, 0)),   # weights/biases: resident
            pl.BlockSpec((1, H1_PAD), lambda i: (0, 0)),
            pl.BlockSpec((H1_PAD, H2_PAD), lambda i: (0, 0)),
            pl.BlockSpec((1, H2_PAD), lambda i: (0, 0)),
            pl.BlockSpec((H2_PAD, D_OUT), lambda i: (0, 0)),
            pl.BlockSpec((1, D_OUT), lambda i: (0, 0)),
        ],
        out_specs=pl.BlockSpec((tile_b, D_OUT), lambda i: (i, 0)),
        compiler_params=pltpu.CompilerParams(
            dimension_semantics=("parallel",),        # megacore-shard batch tiles (v7x)
            vmem_limit_bytes=32 * 1024 * 1024,        # tile_b=1024: ~8 MiB working set
        ),
        cost_estimate=pl.CostEstimate(
            flops=flops,
            transcendentals=B * D_OUT,                # exp per logit
            bytes_accessed=bytes_accessed,
        ),
    )(x, w1p, b1p, w2p, b2p, w3p, b3p)


def mlp_forward(x, params, tile_b=None):
    """x: (B, 784) float32.  params: output of prepare_params().  Returns (B, 10) probs."""
    B = x.shape[0]
    if tile_b is None:
        tile_b = _select_tile_b(B)
    return _mlp_pallas(x, *params, tile_b=tile_b)


def init_linear_params(key, fan_in, fan_out):
    """Deterministic init mimicking torch.nn.Linear default U(-1/sqrt(fan_in), +...)."""
    kw, kb = jax.random.split(key)
    bound = 1.0 / jnp.sqrt(jnp.float32(fan_in))
    w = jax.random.uniform(kw, (fan_in, fan_out), jnp.float32, -bound, bound)  # (in, out)
    b = jax.random.uniform(kb, (1, fan_out), jnp.float32, -bound, bound)
    return w, b


if __name__ == "__main__":
    # TODO(synk): the PyTorch class's training loop (Adam / CrossEntropyLoss) and sklearn
    # metric evaluation are host-side driver code, not part of the forward kernel.
    key = jax.random.PRNGKey(0)
    k_x, k1, k2, k3 = jax.random.split(key, 4)

    B = 40  # small batch; with tile_b=16 this exercises grid>1 and the ragged last block
    x = jax.random.normal(k_x, (B, D_IN), dtype=jnp.float32)

    w1, b1 = init_linear_params(k1, D_IN, H1)
    w2, b2 = init_linear_params(k2, H1, H2)
    w3, b3 = init_linear_params(k3, H2, D_OUT)

    params = prepare_params(w1, b1, w2, b2, w3, b3)  # one-time weight prep

    y = mlp_forward(x, params, tile_b=16)
    y = jax.block_until_ready(y)

    assert y.shape == (B, D_OUT)
    # softmax rows sum to 1 (exact divide -> tight tolerance)
    assert jnp.allclose(jnp.sum(y, axis=1), 1.0, atol=1e-5)

    # reference mirroring the kernel's bf16-MXU / f32-accumulate numerics
    bf = jnp.bfloat16
    h1 = jnp.maximum(jnp.dot(x.astype(bf), w1.astype(bf),
                             preferred_element_type=jnp.float32) + b1, 0.0)
    h2 = jnp.maximum(jnp.dot(h1.astype(bf), w2.astype(bf),
                             preferred_element_type=jnp.float32) + b2, 0.0)
    logits = jnp.dot(h2.astype(bf), w3.astype(bf),
                     preferred_element_type=jnp.float32) + b3
    ref = jax.nn.softmax(logits, axis=1)
    assert jnp.allclose(y, ref, atol=5e-3), float(jnp.max(jnp.abs(y - ref)))

    # also stay close to the full-f32 PyTorch-equivalent forward
    h1f = jnp.maximum(x @ w1 + b1, 0.0)
    h2f = jnp.maximum(h1f @ w2 + b2, 0.0)
    ref_f32 = jax.nn.softmax(h2f @ w3 + b3, axis=1)
    assert jnp.allclose(y, ref_f32, atol=2e-2)

    # exercise the default (large-batch) tile-selection path once as well
    y2 = jax.block_until_ready(mlp_forward(x, params))
    assert jnp.allclose(y2, y, atol=1e-6)

    print("KERNEL_OK")
</pallas_src>

<mosaic_0001>
module attributes {stable_mosaic.version = 11 : i64} {
  func.func @mlp_kernel(%arg0: i32, %arg1: memref<16x784xf32, #tpu.memory_space<vmem>>, %arg2: memref<784x256xbf16, #tpu.memory_space<vmem>>, %arg3: memref<1x256xf32, #tpu.memory_space<vmem>>, %arg4: memref<256x128xbf16, #tpu.memory_space<vmem>>, %arg5: memref<1x128xf32, #tpu.memory_space<vmem>>, %arg6: memref<128x10xbf16, #tpu.memory_space<vmem>>, %arg7: memref<1x10xf32, #tpu.memory_space<vmem>>, %arg8: memref<16x10xf32, #tpu.memory_space<vmem>>) attributes {dimension_semantics = [#tpu.dimension_semantics<parallel>], iteration_bounds = array<i64: 3>, scalar_prefetch = 0 : i64, scratch_operands = 0 : i64, tpu.core_type = #tpu.core_type<tc>, window_params = [{transform_indices = @transform_0, window_bounds = array<i64: 16, 784>}, {pipeline_mode = #tpu.pipeline_mode<synchronous>, transform_indices = @transform_1, window_bounds = array<i64: 784, 256>}, {pipeline_mode = #tpu.pipeline_mode<synchronous>, transform_indices = @transform_2, window_bounds = array<i64: 1, 256>}, {pipeline_mode = #tpu.pipeline_mode<synchronous>, transform_indices = @transform_3, window_bounds = array<i64: 256, 128>}, {pipeline_mode = #tpu.pipeline_mode<synchronous>, transform_indices = @transform_4, window_bounds = array<i64: 1, 128>}, {pipeline_mode = #tpu.pipeline_mode<synchronous>, transform_indices = @transform_5, window_bounds = array<i64: 128, 10>}, {pipeline_mode = #tpu.pipeline_mode<synchronous>, transform_indices = @transform_6, window_bounds = array<i64: 1, 10>}, {transform_indices = @transform_7, window_bounds = array<i64: 16, 10>}]} {
    %c0 = arith.constant 0 : index
    %c0_0 = arith.constant 0 : index
    %0 = vector.load %arg1[%c0, %c0_0] : memref<16x784xf32, #tpu.memory_space<vmem>>, vector<16x784xf32>
    %1 = arith.truncf %0 : vector<16x784xf32> to vector<16x784xbf16>
    %c0_1 = arith.constant 0 : index
    %c0_2 = arith.constant 0 : index
    %2 = vector.load %arg2[%c0_1, %c0_2] : memref<784x256xbf16, #tpu.memory_space<vmem>>, vector<784x256xbf16>
    %cst = arith.constant dense<0.000000e+00> : vector<16x256xf32>
    %3 = tpu.matmul %1, %2, %cst {dimension_numbers = #tpu.dot_dimension_numbers<[1], [0], [0], [1], [0, 0, 1, 1], [], []>} : vector<16x784xbf16>, vector<784x256xbf16>, vector<16x256xf32> -> vector<16x256xf32>
    %c0_3 = arith.constant 0 : index
    %c0_4 = arith.constant 0 : index
    %4 = vector.load %arg3[%c0_3, %c0_4] : memref<1x256xf32, #tpu.memory_space<vmem>>, vector<1x256xf32>
    %5 = vector.broadcast %4 : vector<1x256xf32> to vector<16x256xf32>
    %6 = arith.addf %3, %5 : vector<16x256xf32>
    %cst_5 = arith.constant 0.000000e+00 : f32
    %7 = vector.broadcast %cst_5 : f32 to vector<16x256xf32>
    %8 = arith.maximumf %6, %7 : vector<16x256xf32>
    %9 = arith.truncf %8 : vector<16x256xf32> to vector<16x256xbf16>
    %c0_6 = arith.constant 0 : index
    %c0_7 = arith.constant 0 : index
    %10 = vector.load %arg4[%c0_6, %c0_7] : memref<256x128xbf16, #tpu.memory_space<vmem>>, vector<256x128xbf16>
    %cst_8 = arith.constant dense<0.000000e+00> : vector<16x128xf32>
    %11 = tpu.matmul %9, %10, %cst_8 {dimension_numbers = #tpu.dot_dimension_numbers<[1], [0], [0], [1], [0, 0, 1, 1], [], []>} : vector<16x256xbf16>, vector<256x128xbf16>, vector<16x128xf32> -> vector<16x128xf32>
    %c0_9 = arith.constant 0 : index
    %c0_10 = arith.constant 0 : index
    %12 = vector.load %arg5[%c0_9, %c0_10] : memref<1x128xf32, #tpu.memory_space<vmem>>, vector<1x128xf32>
    %13 = vector.broadcast %12 : vector<1x128xf32> to vector<16x128xf32>
    %14 = arith.addf %11, %13 : vector<16x128xf32>
    %cst_11 = arith.constant 0.000000e+00 : f32
    %15 = vector.broadcast %cst_11 : f32 to vector<16x128xf32>
    %16 = arith.maximumf %14, %15 : vector<16x128xf32>
    %17 = arith.truncf %16 : vector<16x128xf32> to vector<16x128xbf16>
    %c0_12 = arith.constant 0 : index
    %c0_13 = arith.constant 0 : index
    %18 = vector.load %arg6[%c0_12, %c0_13] : memref<128x10xbf16, #tpu.memory_space<vmem>>, vector<128x10xbf16>
    %cst_14 = arith.constant dense<0.000000e+00> : vector<16x10xf32>
    %19 = tpu.matmul %17, %18, %cst_14 {dimension_numbers = #tpu.dot_dimension_numbers<[1], [0], [0], [1], [0, 0, 1, 1], [], []>} : vector<16x128xbf16>, vector<128x10xbf16>, vector<16x10xf32> -> vector<16x10xf32>
    %c0_15 = arith.constant 0 : index
    %c0_16 = arith.constant 0 : index
    %20 = vector.load %arg7[%c0_15, %c0_16] : memref<1x10xf32, #tpu.memory_space<vmem>>, vector<1x10xf32>
    %21 = vector.broadcast %20 : vector<1x10xf32> to vector<16x10xf32>
    %22 = arith.addf %19, %21 : vector<16x10xf32>
    %cst_17 = arith.constant dense<0xFF800000> : vector<16xf32>
    %23 = vector.multi_reduction <maximumf>, %22, %cst_17 [1] : vector<16x10xf32> to vector<16xf32>
    %24 = vector.shape_cast %23 : vector<16xf32> to vector<16x1xf32>
    %25 = vector.broadcast %24 : vector<16x1xf32> to vector<16x10xf32>
    %26 = arith.subf %22, %25 : vector<16x10xf32>
    %27 = math.exp %26 : vector<16x10xf32>
    %cst_18 = arith.constant dense<0.000000e+00> : vector<16xf32>
    %28 = vector.multi_reduction <add>, %27, %cst_18 [1] : vector<16x10xf32> to vector<16xf32>
    %29 = vector.shape_cast %28 : vector<16xf32> to vector<16x1xf32>
    %30 = vector.broadcast %29 : vector<16x1xf32> to vector<16x10xf32>
    %31 = arith.divf %27, %30 : vector<16x10xf32>
    %c0_19 = arith.constant 0 : index
    %c0_20 = arith.constant 0 : index
    %32 = vector.load %arg8[%c0_19, %c0_20] : memref<16x10xf32, #tpu.memory_space<vmem>>, vector<16x10xf32>
    tpu.vector_store %arg8[%c0_19, %c0_20], %31 {strides = array<i32>} : memref<16x10xf32, #tpu.memory_space<vmem>>, vector<16x10xf32>,
    return
  }
  func.func @transform_0(%arg0: i32) -> (i32, i32) {
    %c0_i32 = arith.constant 0 : i32
    %c0_i32_0 = arith.constant 0 : i32
    return %arg0, %c0_i32 : i32, i32
  }
  func.func @transform_1(%arg0: i32) -> (i32, i32) {
    %c0_i32 = arith.constant 0 : i32
    %c0_i32_0 = arith.constant 0 : i32
    %c0_i32_1 = arith.constant 0 : i32
    return %c0_i32, %c0_i32_0 : i32, i32
  }
  func.func @transform_2(%arg0: i32) -> (i32, i32) {
    %c0_i32 = arith.constant 0 : i32
    %c0_i32_0 = arith.constant 0 : i32
    %c0_i32_1 = arith.constant 0 : i32
    return %c0_i32, %c0_i32_0 : i32, i32
  }
  func.func @transform_3(%arg0: i32) -> (i32, i32) {
    %c0_i32 = arith.constant 0 : i32
    %c0_i32_0 = arith.constant 0 : i32
    %c0_i32_1 = arith.constant 0 : i32
    return %c0_i32, %c0_i32_0 : i32, i32
  }
  func.func @transform_4(%arg0: i32) -> (i32, i32) {
    %c0_i32 = arith.constant 0 : i32
    %c0_i32_0 = arith.constant 0 : i32
    %c0_i32_1 = arith.constant 0 : i32
    return %c0_i32, %c0_i32_0 : i32, i32
  }
  func.func @transform_5(%arg0: i32) -> (i32, i32) {
    %c0_i32 = arith.constant 0 : i32
    %c0_i32_0 = arith.constant 0 : i32
    %c0_i32_1 = arith.constant 0 : i32
    return %c0_i32, %c0_i32_0 : i32, i32
  }
  func.func @transform_6(%arg0: i32) -> (i32, i32) {
    %c0_i32 = arith.constant 0 : i32
    %c0_i32_0 = arith.constant 0 : i32
    %c0_i32_1 = arith.constant 0 : i32
    return %c0_i32, %c0_i32_0 : i32, i32
  }
  func.func @transform_7(%arg0: i32) -> (i32, i32) {
    %c0_i32 = arith.constant 0 : i32
    %c0_i32_0 = arith.constant 0 : i32
    return %arg0, %c0_i32 : i32, i32
  }
}

</mosaic_0001>

<llo_original>
// kernel: _mlp_pallas.1
$region0: #{_mlp_pallas.1}
  #allocation0 [shape = 'u32[]', space=smem, size = 0x4, offset = 0x4, fixed_abs, tag = 'smem constant byte address 0x4 - core index']
  #allocation1 [shape = 'u32[144,128]{1,0:T(1,128)}', space=vmem, size = 0x12000, scoped, tag = 'internal scratch']
  %s0 = inlined_call_operand.hbm [shape: f32[40,784], index: 0, kind: input, shape index: {}]
  %s1 = inlined_call_operand.hbm [shape: bf16[784,256], index: 1, kind: input, shape index: {}]
  %s2 = inlined_call_operand.vmem [shape: f32[1,256], index: 2, kind: input, shape index: {}]
  %s3 = inlined_call_operand.hbm [shape: bf16[256,128], index: 3, kind: input, shape index: {}]
  %s4 = inlined_call_operand.vmem [shape: f32[1,128], index: 4, kind: input, shape index: {}]
  %s5 = inlined_call_operand.vmem [shape: bf16[128,10], index: 5, kind: input, shape index: {}]
  %s6 = inlined_call_operand.vmem [shape: f32[1,10], index: 6, kind: input, shape index: {}]
  %s7 = inlined_call_operand.vmem [shape: f32[40,10], index: 7, kind: output, shape index: {}]
  %s8 = sld [smem:[#allocation0]]
  $region121: #{_mlp_pallas.1} parent=0
    _
  %s10 = ssub.s32 1, %s8
  %s11 = scalar_select 0, %s10, %s8
  $region1: #{_mlp_pallas.1} parent=0
    #allocation2 [shape = 'u8[114688]{0}', space=vmem, size = 0x1c000, scoped, tag = 'input window, operand 0']
    #allocation3 [shape = 's32[2]{0}', space=sflag, size = 0x8, scoped, tag = 'scoped memory for _mlp_pallas.1']
    #allocation4 [shape = 'u8[401408]{0}', space=vmem, size = 0x62000, scoped, tag = 'input window, operand 1, single buffered']
    #allocation5 [shape = 's32[1]{0}', space=sflag, size = 0x4, scoped, tag = 'scoped memory for _mlp_pallas.1']
    #allocation6 [shape = 'u8[65536]{0}', space=vmem, size = 0x10000, scoped, tag = 'input window, operand 3, single buffered']
    #allocation7 [shape = 'u8[16384]{0}', space=vmem, size = 0x4000, scoped, tag = 'output window, operand 0']
    %12 = vsyncpa [#allocation3], 0
    %s13 = scalar_lea.sflag [#allocation3], 1
    %14 = vsyncpa %s13, 0
    %15 = vsyncpa [#allocation5], 0
    loop: start=0, step=1, limit=5
    $region2: #{_mlp_pallas.1} parent=1 // loop_pre_header
      _
    $region3: #{_mlp_pallas.1} parent=1 // loop_header
      %s17 = sphi 0, %s21
      %p18 = scmp.ge.s32.totalorder %s17, 5
      %s27 = sphi 0, %s29
      %s30 = sphi 0, %s27
      %s31 = sphi 0, %s30
      %s47 = sphi 0, %s31
      %s51 = sphi 0, %s51
      %s53 = sphi 0, %s51
      %s54 = sphi 0, %s53
      %s68 = sphi 0, %s54
      %s72 = sphi 0, %s72
      %s74 = sphi 0, %s72
      %s75 = sphi 0, %s74
      %s89 = sphi 0, %s75
      %s93 = sphi 0, %s93
      %s95 = sphi 0, %s93
      %s96 = sphi 0, %s95
      %s110 = sphi 0, %s96
      %s114 = sphi 0, %s114
      %s116 = sphi 0, %s114
      %s117 = sphi 0, %s116
      %s131 = sphi 0, %s117
      %s135 = sphi 0, %s135
      %s137 = sphi 0, %s135
      %s138 = sphi 0, %s137
      %s152 = sphi 0, %s138
      %s156 = sphi 0, %s156
      %s158 = sphi 0, %s156
      %s159 = sphi 0, %s158
      %s173 = sphi 0, %s159
      %s179 = sphi 0, %s181
      %s182 = sphi 0, %s179
      %s183 = sphi 0, %s182
      %s199 = sphi 0, %s183
    $region4: #{_mlp_pallas.1} parent=1 // loop_header_branch
      %20 = sbr.rel (%p18) target = $region8
    $region5: #{_mlp_pallas.1} parent=1 // loop_body
      %s22 = ssub.s32 %s17, 1
      %s23 = ssub.s32 %s17, 2
      %s24 = sadd.s32 %s17, 1
      %s25 = ssub.s32 %s17, %s24
      %p26 = scmp.eq.s32.totalorder %s25, 0
      %s28 = sadd.s32 %s27, 1
      %s29 = scalar_select %p26, %s27, %s28
      %p32 = pneg %p26
      %p33 = scmp.eq.s32.totalorder %s17, 2
      %p34 = por %p32, %p33
      %p35 = scmp.ne.s32.totalorder %s27, %s30
      %p36 = scmp.eq.s32.totalorder %s17, 0
      %p37 = por %p35, %p36
      %p38 = scmp.ne.s32.totalorder %s27, %s30
      %p39 = scmp.eq.s32.totalorder %s22, 2
      %p40 = por %p38, %p39
      %p41 = scmp.ne.s32.totalorder %s30, %s31
      %p42 = scmp.eq.s32.totalorder %s22, 0
      %p43 = por %p41, %p42
      %p44 = scmp.ne.s32.totalorder %s30, %s31
      %p45 = scmp.eq.s32.totalorder %s23, 2
      %p46 = por %p44, %p45
      %p48 = scmp.ne.s32.totalorder %s31, %s47
      %p49 = scmp.eq.s32.totalorder %s23, 0
      %p50 = por %p48, %p49
      %s52 = sadd.s32 %s51, 1
      %p55 = scmp.eq.s32.totalorder %s17, 2
      %p56 = scmp.ne.s32.totalorder %s51, %s53
      %p57 = scmp.eq.s32.totalorder %s17, 0
      %p58 = por %p56, %p57
      %p59 = scmp.ne.s32.totalorder %s51, %s53
      %p60 = scmp.eq.s32.totalorder %s22, 2
      %p61 = por %p59, %p60
      %p62 = scmp.ne.s32.totalorder %s53, %s54
      %p63 = scmp.eq.s32.totalorder %s22, 0
      %p64 = por %p62, %p63
      %p65 = scmp.ne.s32.totalorder %s53, %s54
      %p66 = scmp.eq.s32.totalorder %s23, 2
      %p67 = por %p65, %p66
      %p69 = scmp.ne.s32.totalorder %s54, %s68
      %p70 = scmp.eq.s32.totalorder %s23, 0
      %p71 = por %p69, %p70
      %s73 = sadd.s32 %s72, 1
      %p76 = scmp.eq.s32.totalorder %s17, 2
      %p77 = scmp.ne.s32.totalorder %s72, %s74
      %p78 = scmp.eq.s32.totalorder %s17, 0
      %p79 = por %p77, %p78
      %p80 = scmp.ne.s32.totalorder %s72, %s74
      %p81 = scmp.eq.s32.totalorder %s22, 2
      %p82 = por %p80, %p81
      %p83 = scmp.ne.s32.totalorder %s74, %s75
      %p84 = scmp.eq.s32.totalorder %s22, 0
      %p85 = por %p83, %p84
      %p86 = scmp.ne.s32.totalorder %s74, %s75
      %p87 = scmp.eq.s32.totalorder %s23, 2
      %p88 = por %p86, %p87
      %p90 = scmp.ne.s32.totalorder %s75, %s89
      %p91 = scmp.eq.s32.totalorder %s23, 0
      %p92 = por %p90, %p91
      %s94 = sadd.s32 %s93, 1
      %p97 = scmp.eq.s32.totalorder %s17, 2
      %p98 = scmp.ne.s32.totalorder %s93, %s95
      %p99 = scmp.eq.s32.totalorder %s17, 0
      %p100 = por %p98, %p99
      %p101 = scmp.ne.s32.totalorder %s93, %s95
      %p102 = scmp.eq.s32.totalorder %s22, 2
      %p103 = por %p101, %p102
      %p104 = scmp.ne.s32.totalorder %s95, %s96
      %p105 = scmp.eq.s32.totalorder %s22, 0
      %p106 = por %p104, %p105
      %p107 = scmp.ne.s32.totalorder %s95, %s96
      %p108 = scmp.eq.s32.totalorder %s23, 2
      %p109 = por %p107, %p108
      %p111 = scmp.ne.s32.totalorder %s96, %s110
      %p112 = scmp.eq.s32.totalorder %s23, 0
      %p113 = por %p111, %p112
      %s115 = sadd.s32 %s114, 1
      %p118 = scmp.eq.s32.totalorder %s17, 2
      %p119 = scmp.ne.s32.totalorder %s114, %s116
      %p120 = scmp.eq.s32.totalorder %s17, 0
      %p121 = por %p119, %p120
      %p122 = scmp.ne.s32.totalorder %s114, %s116
      %p123 = scmp.eq.s32.totalorder %s22, 2
      %p124 = por %p122, %p123
      %p125 = scmp.ne.s32.totalorder %s116, %s117
      %p126 = scmp.eq.s32.totalorder %s22, 0
      %p127 = por %p125, %p126
      %p128 = scmp.ne.s32.totalorder %s116, %s117
      %p129 = scmp.eq.s32.totalorder %s23, 2
      %p130 = por %p128, %p129
      %p132 = scmp.ne.s32.totalorder %s117, %s131
      %p133 = scmp.eq.s32.totalorder %s23, 0
      %p134 = por %p132, %p133
      %s136 = sadd.s32 %s135, 1
      %p139 = scmp.eq.s32.totalorder %s17, 2
      %p140 = scmp.ne.s32.totalorder %s135, %s137
      %p141 = scmp.eq.s32.totalorder %s17, 0
      %p142 = por %p140, %p141
      %p143 = scmp.ne.s32.totalorder %s135, %s137
      %p144 = scmp.eq.s32.totalorder %s22, 2
      %p145 = por %p143, %p144
      %p146 = scmp.ne.s32.totalorder %s137, %s138
      %p147 = scmp.eq.s32.totalorder %s22, 0
      %p148 = por %p146, %p147
      %p149 = scmp.ne.s32.totalorder %s137, %s138
      %p150 = scmp.eq.s32.totalorder %s23, 2
      %p151 = por %p149, %p150
      %p153 = scmp.ne.s32.totalorder %s138, %s152
      %p154 = scmp.eq.s32.totalorder %s23, 0
      %p155 = por %p153, %p154
      %s157 = sadd.s32 %s156, 1
      %p160 = scmp.eq.s32.totalorder %s17, 2
      %p161 = scmp.ne.s32.totalorder %s156, %s158
      %p162 = scmp.eq.s32.totalorder %s17, 0
      %p163 = por %p161, %p162
      %p164 = scmp.ne.s32.totalorder %s156, %s158
      %p165 = scmp.eq.s32.totalorder %s22, 2
      %p166 = por %p164, %p165
      %p167 = scmp.ne.s32.totalorder %s158, %s159
      %p168 = scmp.eq.s32.totalorder %s22, 0
      %p169 = por %p167, %p168
      %p170 = scmp.ne.s32.totalorder %s158, %s159
      %p171 = scmp.eq.s32.totalorder %s23, 2
      %p172 = por %p170, %p171
      %p174 = scmp.ne.s32.totalorder %s159, %s173
      %p175 = scmp.eq.s32.totalorder %s23, 0
      %p176 = por %p174, %p175
      %s177 = ssub.s32 %s17, %s24
      %p178 = scmp.eq.s32.totalorder %s177, 0
      %s180 = sadd.s32 %s179, 1
      %s181 = scalar_select %p178, %s179, %s180
      %p184 = pneg %p178
      %p185 = scmp.eq.s32.totalorder %s17, 2
      %p186 = por %p184, %p185
      %p187 = scmp.ne.s32.totalorder %s179, %s182
      %p188 = scmp.eq.s32.totalorder %s17, 0
      %p189 = por %p187, %p188
      %p190 = scmp.ne.s32.totalorder %s179, %s182
      %p191 = scmp.eq.s32.totalorder %s22, 2
      %p192 = por %p190, %p191
      %p193 = scmp.ne.s32.totalorder %s182, %s183
      %p194 = scmp.eq.s32.totalorder %s22, 0
      %p195 = por %p193, %p194
      %p196 = scmp.ne.s32.totalorder %s182, %s183
      %p197 = scmp.eq.s32.totalorder %s23, 2
      %p198 = por %p196, %p197
      %p200 = scmp.ne.s32.totalorder %s183, %s199
      %p201 = scmp.eq.s32.totalorder %s23, 0
      %p202 = por %p200, %p201
      %p203 = scmp.le.s32.totalorder 1, %s17
      %p204 = scmp.lt.s32.totalorder %s17, 4
      %p205 = pnand %p203, %p204
      %p206 = pneg %p205
      // Predicated region
      $region9: #{_mlp_pallas.1} parent=5 // pred_check
        _
      $region10: #{_mlp_pallas.1} parent=5 // pred_check_branch
        %208 = sbr.rel (%p205) target = $region12
      $region11: #{_mlp_pallas.1} parent=5 // pred_region
        %s209 = ssub.s32 %s17, 1
        // Predicated region
        $region13: #{_mlp_pallas.1} parent=11 // pred_check
          %p210 = pneg %p64
        $region14: #{_mlp_pallas.1} parent=11 // pred_check_branch
          %212 = sbr.rel (%p210) target = $region16
        $region15: #{_mlp_pallas.1} parent=11 // pred_region
          %s214 = ssub.s32 12544, 12544
          %215 = vsyncadd [#allocation5], %s214
          %s216 = sshll.u32 [#allocation4], 4
          %s217 = int_to_ptr.vmem [resolvable:$true] %s216
          %222 = dma.hbm_to_vmem [thread:$0]  %s1, 12544, %s217, [#allocation5], 128, 128, 8
        $region16: #{_mlp_pallas.1} parent=11 // pred_fallthru
          _
        // Predicated region
        $region17: #{_mlp_pallas.1} parent=11 // pred_check
          %p223 = pneg %p85
        $region18: #{_mlp_pallas.1} parent=11 // pred_check_branch
          %225 = sbr.rel (%p223) target = $region20
        $region19: #{_mlp_pallas.1} parent=11 // pred_region
          _
        $region20: #{_mlp_pallas.1} parent=11 // pred_fallthru
          _
        // Predicated region
        $region21: #{_mlp_pallas.1} parent=11 // pred_check
          %p226 = pneg %p106
        $region22: #{_mlp_pallas.1} parent=11 // pred_check_branch
          %228 = sbr.rel (%p226) target = $region24
        $region23: #{_mlp_pallas.1} parent=11 // pred_region
          %s230 = ssub.s32 2048, 2048
          %231 = vsyncadd [#allocation5], %s230
          %s232 = sshll.u32 [#allocation6], 4
          %s233 = int_to_ptr.vmem [resolvable:$true] %s232
          %238 = dma.hbm_to_vmem [thread:$0]  %s3, 2048, %s233, [#allocation5], 64, 64, 4
        $region24: #{_mlp_pallas.1} parent=11 // pred_fallthru
          _
        // Predicated region
        $region25: #{_mlp_pallas.1} parent=11 // pred_check
          %p239 = pneg %p127
        $region26: #{_mlp_pallas.1} parent=11 // pred_check_branch
          %241 = sbr.rel (%p239) target = $region28
        $region27: #{_mlp_pallas.1} parent=11 // pred_region
          _
        $region28: #{_mlp_pallas.1} parent=11 // pred_fallthru
          _
        // Predicated region
        $region29: #{_mlp_pallas.1} parent=11 // pred_check
          %p242 = pneg %p148
        $region30: #{_mlp_pallas.1} parent=11 // pred_check_branch
          %244 = sbr.rel (%p242) target = $region32
        $region31: #{_mlp_pallas.1} parent=11 // pred_region
          _
        $region32: #{_mlp_pallas.1} parent=11 // pred_fallthru
          _
        // Predicated region
        $region33: #{_mlp_pallas.1} parent=11 // pred_check
          %p245 = pneg %p169
        $region34: #{_mlp_pallas.1} parent=11 // pred_check_branch
          %247 = sbr.rel (%p245) target = $region36
        $region35: #{_mlp_pallas.1} parent=11 // pred_region
          _
        $region36: #{_mlp_pallas.1} parent=11 // pred_fallthru
          _
      $region12: #{_mlp_pallas.1} parent=5 // pred_fallthru
        _
      %p248 = scmp.lt.s32.totalorder %s17, 3
      // Predicated region
      $region37: #{_mlp_pallas.1} parent=5 // pred_check
        %p249 = pneg %p248
      $region38: #{_mlp_pallas.1} parent=5 // pred_check_branch
        %251 = sbr.rel (%p249) target = $region40
      $region39: #{_mlp_pallas.1} parent=5 // pred_region
        // Predicated region
        $region41: #{_mlp_pallas.1} parent=39 // pred_check
          %p252 = pneg %p37
        $region42: #{_mlp_pallas.1} parent=39 // pred_check_branch
          %254 = sbr.rel (%p252) target = $region44
        $region43: #{_mlp_pallas.1} parent=39 // pred_region
          %s255 = sand.u32 %s27, 1
          %s256 = scalar_lea.sflag [#allocation3], %s255
          %s257 = sand.u32 %s27, 1
          %s258 = smul.addr %s257, 112
          %s259 = scalar_lea.vmem [#allocation2], %s258
          %s260 = smul.u32 2, %s17
          %s261 = ssub.s32 5, %s260
          %p262 = scmp.lt.s32.totalorder %s261, 2
          %s263 = scalar_select %p262, %s261, 2
          %s264 = smul.u32 128, %s263
          %s265 = smul.u32 %s264, 7
          %s267 = ssub.s32 1792, %s265
          %268 = vsyncadd %s256, %s267
          %p269 = scmp.ne.s32.totalorder 0, %s265
          %s270 = smul.addr %s260, 7
          %s271 = smul.addr %s270, 128
          %s272 = scalar_lea.hbm %s0, %s271
          %s273 = smul.u32 56, %s263
          %s274 = sshll.u32 %s259, 4
          %s275 = int_to_ptr.vmem [resolvable:$true] %s274
          %s276 = sshll.u32 %s273, 4
          %280 = dma.hbm_to_vmem [thread:$0]  (%p269), %s272, %s276, %s275, %s256, 896, 896, 56
        $region44: #{_mlp_pallas.1} parent=39 // pred_fallthru
          _
      $region40: #{_mlp_pallas.1} parent=5 // pred_fallthru
        _
      %p281 = scmp.le.s32.totalorder 1, %s17
      %p282 = scmp.lt.s32.totalorder %s17, 4
      %p283 = pnand %p281, %p282
      %p284 = pneg %p283
      // Predicated region
      $region45: #{_mlp_pallas.1} parent=5 // pred_check
        _
      $region46: #{_mlp_pallas.1} parent=5 // pred_check_branch
        %286 = sbr.rel (%p283) target = $region48
      $region47: #{_mlp_pallas.1} parent=5 // pred_region
        %s287 = ssub.s32 %s17, 1
        %s288 = sand.u32 %s30, 1
        %s289 = scalar_lea.sflag [#allocation3], %s288
        %s290 = sand.u32 %s30, 1
        %s291 = smul.addr %s290, 112
        %s292 = scalar_lea.vmem [#allocation2], %s291
        // Predicated region
        $region49: #{_mlp_pallas.1} parent=47 // pred_check
          %p293 = pneg %p43
        $region50: #{_mlp_pallas.1} parent=47 // pred_check_branch
          %295 = sbr.rel (%p293) target = $region52
        $region51: #{_mlp_pallas.1} parent=47 // pred_region
          %296 = dma.done %s289, 1792
        $region52: #{_mlp_pallas.1} parent=47 // pred_fallthru
          _
        // Predicated region
        $region53: #{_mlp_pallas.1} parent=47 // pred_check
          %p297 = pneg %p64
        $region54: #{_mlp_pallas.1} parent=47 // pred_check_branch
          %299 = sbr.rel (%p297) target = $region56
        $region55: #{_mlp_pallas.1} parent=47 // pred_region
          %300 = dma.done [#allocation5], 12544
        $region56: #{_mlp_pallas.1} parent=47 // pred_fallthru
          _
        // Predicated region
        $region57: #{_mlp_pallas.1} parent=47 // pred_check
          %p301 = pneg %p106
        $region58: #{_mlp_pallas.1} parent=47 // pred_check_branch
          %303 = sbr.rel (%p301) target = $region60
        $region59: #{_mlp_pallas.1} parent=47 // pred_region
          %304 = dma.done [#allocation5], 2048
        $region60: #{_mlp_pallas.1} parent=47 // pred_fallthru
          _
        %s305 = sand.u32 %s30, 1
        %s306 = scalar_lea.sflag [#allocation3], %s305
        %s307 = sand.u32 %s30, 1
        %s308 = smul.addr %s307, 112
        %s309 = scalar_lea.vmem [#allocation2], %s308
        %p310 = pneg %p43
        %p311 = pneg %p40
        %p312 = pneg %p64
        %p313 = pneg %p61
        %p314 = pneg %p85
        %p315 = pneg %p82
        %p316 = pneg %p106
        %p317 = pneg %p103
        %p318 = pneg %p127
        %p319 = pneg %p124
        %p320 = pneg %p148
        %p321 = pneg %p145
        %p322 = pneg %p169
        %p323 = pneg %p166
        %p324 = pneg %p195
        %p325 = pneg %p192
        %s326 = sand.u32 %s182, 1
        %s327 = sand.u32 %s182, 1
        %s328 = smul.addr %s327, 16
        %s329 = scalar_lea.vmem [#allocation7], %s328
        %s330 = smul.u32 2, %s22
        %s331 = ssub.s32 5, %s330
        %p332 = scmp.lt.s32.totalorder %s331, 2
        %s333 = scalar_select %p332, %s331, 2
        %s334 = smul.u32 128, %s333
        %s335 = smul.u32 %s334, 7
        %s336 = smul.u32 2, %s22
        %s337 = ssub.s32 5, %s336
        %p338 = scmp.lt.s32.totalorder %s337, 2
        %s339 = scalar_select %p338, %s337, 2
        %s340 = smul.u32 128, %s339
        %v342 = vld [vmem:[%s292] sm:$0xff]
        %v343 = vld [vmem:[%s292 + $0x8] sm:$0xff]
        %v344 = vld [vmem:[%s292 + $0x10] sm:$0xff]
        %v345 = vld [vmem:[%s292 + $0x18] sm:$0xff]
        %v346 = vld [vmem:[%s292 + $0x20] sm:$0xff]
        %v347 = vld [vmem:[%s292 + $0x28] sm:$0xff]
        %v348 = vld [vmem:[%s292 + $0x30] sm:$0xff]
        %v349 = vld [vmem:[%s292 + $0x38] sm:$0xff]
        %v350 = vld [vmem:[%s292 + $0x40] sm:$0xff]
        %v351 = vld [vmem:[%s292 + $0x48] sm:$0xff]
        %v352 = vld [vmem:[%s292 + $0x50] sm:$0xff]
        %v353 = vld [vmem:[%s292 + $0x58] sm:$0xff]
        %v354 = vld [vmem:[%s292 + $0x60] sm:$0xff]
        %v355 = vld [vmem:[%s292 + $0x68] sm:$0xff]
        %v356 = vpack.c.bf16 %v349, %v342
        %v357 = vpack.c.bf16 %v350, %v343
        %v358 = vpack.c.bf16 %v351, %v344
        %v359 = vpack.c.bf16 %v352, %v345
        %v360 = vpack.c.bf16 %v353, %v346
        %v361 = vpack.c.bf16 %v354, %v347
        %v362 = vpack.c.bf16 %v355, %v348
        %v363 = vld [vmem:[#allocation4] sm:$0xff]
        %v364 = vld [vmem:[#allocation4 + $0x8] sm:$0xff]
        %v365 = vld [vmem:[#allocation4 + $0x10] sm:$0xff]
        %v366 = vld [vmem:[#allocation4 + $0x18] sm:$0xff]
        %v367 = vld [vmem:[#allocation4 + $0x20] sm:$0xff]
        %v368 = vld [vmem:[#allocation4 + $0x28] sm:$0xff]
        %v369 = vld [vmem:[#allocation4 + $0x30] sm:$0xff]
        %v370 = vld [vmem:[#allocation4 + $0x38] sm:$0xff]
        %v371 = vld [vmem:[#allocation4 + $0x40] sm:$0xff]
        %v372 = vld [vmem:[#allocation4 + $0x48] sm:$0xff]
        %v373 = vld [vmem:[#allocation4 + $0x50] sm:$0xff]
        %v374 = vld [vmem:[#allocation4 + $0x58] sm:$0xff]
        %v375 = vld [vmem:[#allocation4 + $0x60] sm:$0xff]
        %v376 = vld [vmem:[#allocation4 + $0x68] sm:$0xff]
        %v377 = vld [vmem:[#allocation4 + $0x70] sm:$0xff]
        %v378 = vld [vmem:[#allocation4 + $0x78] sm:$0xff]
        %v379 = vld [vmem:[#allocation4 + $0x80] sm:$0xff]
        %v380 = vld [vmem:[#allocation4 + $0x88] sm:$0xff]
        %v381 = vld [vmem:[#allocation4 + $0x90] sm:$0xff]
        %v382 = vld [vmem:[#allocation4 + $0x98] sm:$0xff]
        %v383 = vld [vmem:[#allocation4 + $0xa0] sm:$0xff]
        %v384 = vld [vmem:[#allocation4 + $0xa8] sm:$0xff]
        %v385 = vld [vmem:[#allocation4 + $0xb0] sm:$0xff]
        %v386 = vld [vmem:[#allocation4 + $0xb8] sm:$0xff]
        %v387 = vld [vmem:[#allocation4 + $0xc0] sm:$0xff]
        %v388 = vld [vmem:[#allocation4 + $0xc8] sm:$0xff]
        %v389 = vld [vmem:[#allocation4 + $0xd0] sm:$0xff]
        %v390 = vld [vmem:[#allocation4 + $0xd8] sm:$0xff]
        %v391 = vld [vmem:[#allocation4 + $0xe0] sm:$0xff]
        %v392 = vld [vmem:[#allocation4 + $0xe8] sm:$0xff]
        %v393 = vld [vmem:[#allocation4 + $0xf0] sm:$0xff]
        %v394 = vld [vmem:[#allocation4 + $0xf8] sm:$0xff]
        %v395 = vld [vmem:[#allocation4 + $0x100] sm:$0xff]
        %v396 = vld [vmem:[#allocation4 + $0x108] sm:$0xff]
        %v397 = vld [vmem:[#allocation4 + $0x110] sm:$0xff]
        %v398 = vld [vmem:[#allocation4 + $0x118] sm:$0xff]
        %v399 = vld [vmem:[#allocation4 + $0x120] sm:$0xff]
        %v400 = vld [vmem:[#allocation4 + $0x128] sm:$0xff]
        %v401 = vld [vmem:[#allocation4 + $0x130] sm:$0xff]
        %v402 = vld [vmem:[#allocation4 + $0x138] sm:$0xff]
        %v403 = vld [vmem:[#allocation4 + $0x140] sm:$0xff]
        %v404 = vld [vmem:[#allocation4 + $0x148] sm:$0xff]
        %v405 = vld [vmem:[#allocation4 + $0x150] sm:$0xff]
        %v406 = vld [vmem:[#allocation4 + $0x158] sm:$0xff]
        %v407 = vld [vmem:[#allocation4 + $0x160] sm:$0xff]
        %v408 = vld [vmem:[#allocation4 + $0x168] sm:$0xff]
        %v409 = vld [vmem:[#allocation4 + $0x170] sm:$0xff]
        %v410 = vld [vmem:[#allocation4 + $0x178] sm:$0xff]
        %v411 = vld [vmem:[#allocation4 + $0x180] sm:$0xff]
        %v412 = vld [vmem:[#allocation4 + $0x188] sm:$0xff]
        %v413 = vld [vmem:[#allocation4 + $0x190] sm:$0xff]
        %v414 = vld [vmem:[#allocation4 + $0x198] sm:$0xff]
        %v415 = vld [vmem:[#allocation4 + $0x1a0] sm:$0xff]
        %v416 = vld [vmem:[#allocation4 + $0x1a8] sm:$0xff]
        %v417 = vld [vmem:[#allocation4 + $0x1b0] sm:$0xff]
        %v418 = vld [vmem:[#allocation4 + $0x1b8] sm:$0xff]
        %v419 = vld [vmem:[#allocation4 + $0x1c0] sm:$0xff]
        %v420 = vld [vmem:[#allocation4 + $0x1c8] sm:$0xff]
        %v421 = vld [vmem:[#allocation4 + $0x1d0] sm:$0xff]
        %v422 = vld [vmem:[#allocation4 + $0x1d8] sm:$0xff]
        %v423 = vld [vmem:[#allocation4 + $0x1e0] sm:$0xff]
        %v424 = vld [vmem:[#allocation4 + $0x1e8] sm:$0xff]
        %v425 = vld [vmem:[#allocation4 + $0x1f0] sm:$0xff]
        %v426 = vld [vmem:[#allocation4 + $0x1f8] sm:$0xff]
        %v427 = vld [vmem:[#allocation4 + $0x200] sm:$0xff]
        %v428 = vld [vmem:[#allocation4 + $0x208] sm:$0xff]
        %v429 = vld [vmem:[#allocation4 + $0x210] sm:$0xff]
        %v430 = vld [vmem:[#allocation4 + $0x218] sm:$0xff]
        %v431 = vld [vmem:[#allocation4 + $0x220] sm:$0xff]
        %v432 = vld [vmem:[#allocation4 + $0x228] sm:$0xff]
        %v433 = vld [vmem:[#allocation4 + $0x230] sm:$0xff]
        %v434 = vld [vmem:[#allocation4 + $0x238] sm:$0xff]
        %v435 = vld [vmem:[#allocation4 + $0x240] sm:$0xff]
        %v436 = vld [vmem:[#allocation4 + $0x248] sm:$0xff]
        %v437 = vld [vmem:[#allocation4 + $0x250] sm:$0xff]
        %v438 = vld [vmem:[#allocation4 + $0x258] sm:$0xff]
        %v439 = vld [vmem:[#allocation4 + $0x260] sm:$0xff]
        %v440 = vld [vmem:[#allocation4 + $0x268] sm:$0xff]
        %v441 = vld [vmem:[#allocation4 + $0x270] sm:$0xff]
        %v442 = vld [vmem:[#allocation4 + $0x278] sm:$0xff]
        %v443 = vld [vmem:[#allocation4 + $0x280] sm:$0xff]
        %v444 = vld [vmem:[#allocation4 + $0x288] sm:$0xff]
        %v445 = vld [vmem:[#allocation4 + $0x290] sm:$0xff]
        %v446 = vld [vmem:[#allocation4 + $0x298] sm:$0xff]
        %v447 = vld [vmem:[#allocation4 + $0x2a0] sm:$0xff]
        %v448 = vld [vmem:[#allocation4 + $0x2a8] sm:$0xff]
        %v449 = vld [vmem:[#allocation4 + $0x2b0] sm:$0xff]
        %v450 = vld [vmem:[#allocation4 + $0x2b8] sm:$0xff]
        %v451 = vld [vmem:[#allocation4 + $0x2c0] sm:$0xff]
        %v452 = vld [vmem:[#allocation4 + $0x2c8] sm:$0xff]
        %v453 = vld [vmem:[#allocation4 + $0x2d0] sm:$0xff]
        %v454 = vld [vmem:[#allocation4 + $0x2d8] sm:$0xff]
        %v455 = vld [vmem:[#allocation4 + $0x2e0] sm:$0xff]
        %v456 = vld [vmem:[#allocation4 + $0x2e8] sm:$0xff]
        %v457 = vld [vmem:[#allocation4 + $0x2f0] sm:$0xff]
        %v458 = vld [vmem:[#allocation4 + $0x2f8] sm:$0xff]
        %v459 = vld [vmem:[#allocation4 + $0x300] sm:$0xff]
        %v460 = vld [vmem:[#allocation4 + $0x308] sm:$0xff]
        %v461 = vld [vmem:[%s2] sm:$0x3]
        %v463 = vlaneseq
        %v464 = vshrl.u32 %v463, 7
        %v465 = vsub.s32 0, %v464
        %v466 = vrot.slane %v461, %v465
        %v467 = vlaneseq
        %v468 = vshrl.u32 %v467, 7
        %v469 = vsub.s32 1, %v468
        %v470 = vrot.slane %v461, %v469
        %v571 = vunpack.c.l.b16 %v363
        %v572 = vunpack.c.h.b16 %v363
        %v573 = vunpack.c.l.b16 %v364
        %v574 = vunpack.c.h.b16 %v364
        %v575 = vunpack.c.l.b16 %v365
        %v576 = vunpack.c.h.b16 %v365
        %v577 = vunpack.c.l.b16 %v366
        %v578 = vunpack.c.h.b16 %v366
        %v579 = vunpack.c.l.b16 %v367
        %v580 = vunpack.c.h.b16 %v367
        %v581 = vunpack.c.l.b16 %v368
        %v582 = vunpack.c.h.b16 %v368
        %v583 = vunpack.c.l.b16 %v369
        %v584 = vunpack.c.h.b16 %v369
        %v585 = vunpack.c.l.b16 %v370
        %v586 = vunpack.c.h.b16 %v370
        %v587 = vunpack.c.l.b16 %v371
        %v588 = vunpack.c.h.b16 %v371
        %v589 = vunpack.c.l.b16 %v372
        %v590 = vunpack.c.h.b16 %v372
        %v591 = vunpack.c.l.b16 %v373
        %v592 = vunpack.c.h.b16 %v373
        %v593 = vunpack.c.l.b16 %v374
        %v594 = vunpack.c.h.b16 %v374
        %v595 = vunpack.c.l.b16 %v375
        %v596 = vunpack.c.h.b16 %v375
        %v597 = vunpack.c.l.b16 %v376
        %v598 = vunpack.c.h.b16 %v376
        %v599 = vunpack.c.l.b16 %v377
        %v600 = vunpack.c.h.b16 %v377
        %v601 = vunpack.c.l.b16 %v378
        %v602 = vunpack.c.h.b16 %v378
        %v603 = vunpack.c.l.b16 %v379
        %v604 = vunpack.c.h.b16 %v379
        %v605 = vunpack.c.l.b16 %v380
        %v606 = vunpack.c.h.b16 %v380
        %v607 = vunpack.c.l.b16 %v381
        %v608 = vunpack.c.h.b16 %v381
        %v609 = vunpack.c.l.b16 %v382
        %v610 = vunpack.c.h.b16 %v382
        %v611 = vunpack.c.l.b16 %v383
        %v612 = vunpack.c.h.b16 %v383
        %v613 = vunpack.c.l.b16 %v384
        %v614 = vunpack.c.h.b16 %v384
        %v615 = vunpack.c.l.b16 %v385
        %v616 = vunpack.c.h.b16 %v385
        %v617 = vunpack.c.l.b16 %v386
        %v618 = vunpack.c.h.b16 %v386
        %v619 = vunpack.c.l.b16 %v387
        %v620 = vunpack.c.h.b16 %v387
        %v621 = vunpack.c.l.b16 %v388
        %v622 = vunpack.c.h.b16 %v388
        %v623 = vunpack.c.l.b16 %v389
        %v624 = vunpack.c.h.b16 %v389
        %v625 = vunpack.c.l.b16 %v390
        %v626 = vunpack.c.h.b16 %v390
        %v627 = vunpack.c.l.b16 %v391
        %v628 = vunpack.c.h.b16 %v391
        %v629 = vunpack.c.l.b16 %v392
        %v630 = vunpack.c.h.b16 %v392
        %v631 = vunpack.c.l.b16 %v393
        %v632 = vunpack.c.h.b16 %v393
        %v633 = vunpack.c.l.b16 %v394
        %v634 = vunpack.c.h.b16 %v394
        %v635 = vunpack.c.l.b16 %v395
        %v636 = vunpack.c.h.b16 %v395
        %v637 = vunpack.c.l.b16 %v396
        %v638 = vunpack.c.h.b16 %v396
        %v639 = vunpack.c.l.b16 %v397
        %v640 = vunpack.c.h.b16 %v397
        %v641 = vunpack.c.l.b16 %v398
        %v642 = vunpack.c.h.b16 %v398
        %v643 = vunpack.c.l.b16 %v399
        %v644 = vunpack.c.h.b16 %v399
        %v645 = vunpack.c.l.b16 %v400
        %v646 = vunpack.c.h.b16 %v400
        %v647 = vunpack.c.l.b16 %v401
        %v648 = vunpack.c.h.b16 %v401
        %v649 = vunpack.c.l.b16 %v402
        %v650 = vunpack.c.h.b16 %v402
        %v651 = vunpack.c.l.b16 %v403
        %v652 = vunpack.c.h.b16 %v403
        %v653 = vunpack.c.l.b16 %v404
        %v654 = vunpack.c.h.b16 %v404
        %v655 = vunpack.c.l.b16 %v405
        %v656 = vunpack.c.h.b16 %v405
        %v657 = vunpack.c.l.b16 %v406
        %v658 = vunpack.c.h.b16 %v406
        %v659 = vunpack.c.l.b16 %v407
        %v660 = vunpack.c.h.b16 %v407
        %v661 = vunpack.c.l.b16 %v408
        %v662 = vunpack.c.h.b16 %v408
        %v663 = vunpack.c.l.b16 %v409
        %v664 = vunpack.c.h.b16 %v409
        %v665 = vunpack.c.l.b16 %v410
        %v666 = vunpack.c.h.b16 %v410
        %v667 = vunpack.c.l.b16 %v411
        %v668 = vunpack.c.h.b16 %v411
        %v669 = vunpack.c.l.b16 %v412
        %v670 = vunpack.c.h.b16 %v412
        %v671 = vunpack.c.l.b16 %v413
        %v672 = vunpack.c.h.b16 %v413
        %v673 = vunpack.c.l.b16 %v414
        %v674 = vunpack.c.h.b16 %v414
        %v675 = vunpack.c.l.b16 %v415
        %v676 = vunpack.c.h.b16 %v415
        %v677 = vunpack.c.l.b16 %v416
        %v678 = vunpack.c.h.b16 %v416
        %v679 = vunpack.c.l.b16 %v417
        %v680 = vunpack.c.h.b16 %v417
        %v681 = vunpack.c.l.b16 %v418
        %v682 = vunpack.c.h.b16 %v418
        %v683 = vunpack.c.l.b16 %v419
        %v684 = vunpack.c.h.b16 %v419
        %v685 = vunpack.c.l.b16 %v420
        %v686 = vunpack.c.h.b16 %v420
        %v687 = vunpack.c.l.b16 %v421
        %v688 = vunpack.c.h.b16 %v421
        %v689 = vunpack.c.l.b16 %v422
        %v690 = vunpack.c.h.b16 %v422
        %v691 = vunpack.c.l.b16 %v423
        %v692 = vunpack.c.h.b16 %v423
        %v693 = vunpack.c.l.b16 %v424
        %v694 = vunpack.c.h.b16 %v424
        %v695 = vunpack.c.l.b16 %v425
        %v696 = vunpack.c.h.b16 %v425
        %v697 = vunpack.c.l.b16 %v426
        %v698 = vunpack.c.h.b16 %v426
        %v699 = vunpack.c.l.b16 %v427
        %v700 = vunpack.c.h.b16 %v427
        %v701 = vunpack.c.l.b16 %v428
        %v702 = vunpack.c.h.b16 %v428
        %v703 = vunpack.c.l.b16 %v429
        %v704 = vunpack.c.h.b16 %v429
        %v705 = vunpack.c.l.b16 %v430
        %v706 = vunpack.c.h.b16 %v430
        %v707 = vunpack.c.l.b16 %v431
        %v708 = vunpack.c.h.b16 %v431
        %v709 = vunpack.c.l.b16 %v432
        %v710 = vunpack.c.h.b16 %v432
        %v711 = vunpack.c.l.b16 %v433
        %v712 = vunpack.c.h.b16 %v433
        %v713 = vunpack.c.l.b16 %v434
        %v714 = vunpack.c.h.b16 %v434
        %v715 = vunpack.c.l.b16 %v435
        %v716 = vunpack.c.h.b16 %v435
        %v717 = vunpack.c.l.b16 %v436
        %v718 = vunpack.c.h.b16 %v436
        %v719 = vunpack.c.l.b16 %v437
        %v720 = vunpack.c.h.b16 %v437
        %v721 = vunpack.c.l.b16 %v438
        %v722 = vunpack.c.h.b16 %v438
        %v723 = vunpack.c.l.b16 %v439
        %v724 = vunpack.c.h.b16 %v439
        %v725 = vunpack.c.l.b16 %v440
        %v726 = vunpack.c.h.b16 %v440
        %v727 = vunpack.c.l.b16 %v441
        %v728 = vunpack.c.h.b16 %v441
        %v729 = vunpack.c.l.b16 %v442
        %v730 = vunpack.c.h.b16 %v442
        %v731 = vunpack.c.l.b16 %v443
        %v732 = vunpack.c.h.b16 %v443
        %v733 = vunpack.c.l.b16 %v444
        %v734 = vunpack.c.h.b16 %v444
        %v735 = vunpack.c.l.b16 %v445
        %v736 = vunpack.c.h.b16 %v445
        %v737 = vunpack.c.l.b16 %v446
        %v738 = vunpack.c.h.b16 %v446
        %v739 = vunpack.c.l.b16 %v447
        %v740 = vunpack.c.h.b16 %v447
        %v741 = vunpack.c.l.b16 %v448
        %v742 = vunpack.c.h.b16 %v448
        %v743 = vunpack.c.l.b16 %v449
        %v744 = vunpack.c.h.b16 %v449
        %v745 = vunpack.c.l.b16 %v450
        %v746 = vunpack.c.h.b16 %v450
        %v747 = vunpack.c.l.b16 %v451
        %v748 = vunpack.c.h.b16 %v451
        %v749 = vunpack.c.l.b16 %v452
        %v750 = vunpack.c.h.b16 %v452
        %v751 = vunpack.c.l.b16 %v453
        %v752 = vunpack.c.h.b16 %v453
        %v753 = vunpack.c.l.b16 %v454
        %v754 = vunpack.c.h.b16 %v454
        %v755 = vunpack.c.l.b16 %v455
        %v756 = vunpack.c.h.b16 %v455
        %v757 = vunpack.c.l.b16 %v456
        %v758 = vunpack.c.h.b16 %v456
        %v759 = vunpack.c.l.b16 %v457
        %v760 = vunpack.c.h.b16 %v457
        %v761 = vunpack.c.l.b16 %v458
        %v762 = vunpack.c.h.b16 %v458
        %v763 = vunpack.c.l.b16 %v459
        %v764 = vunpack.c.h.b16 %v459
        %v765 = vunpack.c.l.b16 %v460
        %v766 = vunpack.c.h.b16 %v460
        %v767 = vpack.c.b16 %v573, %v571
        %v768 = vpack.c.b16 %v574, %v572
        %v769 = vpack.c.b16 %v577, %v575
        %v770 = vpack.c.b16 %v578, %v576
        %v771 = vpack.c.b16 %v581, %v579
        %v772 = vpack.c.b16 %v582, %v580
        %v773 = vpack.c.b16 %v585, %v583
        %v774 = vpack.c.b16 %v586, %v584
        %v775 = vpack.c.b16 %v589, %v587
        %v776 = vpack.c.b16 %v590, %v588
        %v777 = vpack.c.b16 %v593, %v591
        %v778 = vpack.c.b16 %v594, %v592
        %v779 = vpack.c.b16 %v597, %v595
        %v780 = vpack.c.b16 %v598, %v596
        %v781 = vpack.c.b16 %v601, %v599
        %v782 = vpack.c.b16 %v602, %v600
        %v783 = vpack.c.b16 %v605, %v603
        %v784 = vpack.c.b16 %v606, %v604
        %v785 = vpack.c.b16 %v609, %v607
        %v786 = vpack.c.b16 %v610, %v608
        %v787 = vpack.c.b16 %v613, %v611
        %v788 = vpack.c.b16 %v614, %v612
        %v789 = vpack.c.b16 %v617, %v615
        %v790 = vpack.c.b16 %v618, %v616
        %v791 = vpack.c.b16 %v621, %v619
        %v792 = vpack.c.b16 %v622, %v620
        %v793 = vpack.c.b16 %v625, %v623
        %v794 = vpack.c.b16 %v626, %v624
        %v795 = vpack.c.b16 %v629, %v627
        %v796 = vpack.c.b16 %v630, %v628
        %v797 = vpack.c.b16 %v633, %v631
        %v798 = vpack.c.b16 %v634, %v632
        %v799 = vpack.c.b16 %v637, %v635
        %v800 = vpack.c.b16 %v638, %v636
        %v801 = vpack.c.b16 %v641, %v639
        %v802 = vpack.c.b16 %v642, %v640
        %v803 = vpack.c.b16 %v645, %v643
        %v804 = vpack.c.b16 %v646, %v644
        %v805 = vpack.c.b16 %v649, %v647
        %v806 = vpack.c.b16 %v650, %v648
        %v807 = vpack.c.b16 %v653, %v651
        %v808 = vpack.c.b16 %v654, %v652
        %v809 = vpack.c.b16 %v657, %v655
        %v810 = vpack.c.b16 %v658, %v656
        %v811 = vpack.c.b16 %v661, %v659
        %v812 = vpack.c.b16 %v662, %v660
        %v813 = vpack.c.b16 %v665, %v663
        %v814 = vpack.c.b16 %v666, %v664
        %v815 = vpack.c.b16 %v669, %v667
        %v816 = vpack.c.b16 %v670, %v668
        %v817 = vpack.c.b16 %v673, %v671
        %v818 = vpack.c.b16 %v674, %v672
        %v819 = vpack.c.b16 %v677, %v675
        %v820 = vpack.c.b16 %v678, %v676
        %v821 = vpack.c.b16 %v681, %v679
        %v822 = vpack.c.b16 %v682, %v680
        %v823 = vpack.c.b16 %v685, %v683
        %v824 = vpack.c.b16 %v686, %v684
        %v825 = vpack.c.b16 %v689, %v687
        %v826 = vpack.c.b16 %v690, %v688
        %v827 = vpack.c.b16 %v693, %v691
        %v828 = vpack.c.b16 %v694, %v692
        %v829 = vpack.c.b16 %v697, %v695
        %v830 = vpack.c.b16 %v698, %v696
        %v831 = vpack.c.b16 %v701, %v699
        %v832 = vpack.c.b16 %v702, %v700
        %v833 = vpack.c.b16 %v705, %v703
        %v834 = vpack.c.b16 %v706, %v704
        %v835 = vpack.c.b16 %v709, %v707
        %v836 = vpack.c.b16 %v710, %v708
        %v837 = vpack.c.b16 %v713, %v711
        %v838 = vpack.c.b16 %v714, %v712
        %v839 = vpack.c.b16 %v717, %v715
        %v840 = vpack.c.b16 %v718, %v716
        %v841 = vpack.c.b16 %v721, %v719
        %v842 = vpack.c.b16 %v722, %v720
        %v843 = vpack.c.b16 %v725, %v723
        %v844 = vpack.c.b16 %v726, %v724
        %v845 = vpack.c.b16 %v729, %v727
        %v846 = vpack.c.b16 %v730, %v728
        %v847 = vpack.c.b16 %v733, %v731
        %v848 = vpack.c.b16 %v734, %v732
        %v849 = vpack.c.b16 %v737, %v735
        %v850 = vpack.c.b16 %v738, %v736
        %v851 = vpack.c.b16 %v741, %v739
        %v852 = vpack.c.b16 %v742, %v740
        %v853 = vpack.c.b16 %v745, %v743
        %v854 = vpack.c.b16 %v746, %v744
        %v855 = vpack.c.b16 %v749, %v747
        %v856 = vpack.c.b16 %v750, %v748
        %v857 = vpack.c.b16 %v753, %v751
        %v858 = vpack.c.b16 %v754, %v752
        %v859 = vpack.c.b16 %v757, %v755
        %v860 = vpack.c.b16 %v758, %v756
        %v861 = vpack.c.b16 %v761, %v759
        %v862 = vpack.c.b16 %v762, %v760
        %v863 = vpack.c.b16 %v765, %v763
        %v864 = vpack.c.b16 %v766, %v764
        %vm963 = vcmask 130048
        %v965 = vsel %vm963, %v362, 0
        %967 = vmatprep.subr.bf16.mxu0 %v768
        %968 = vmatpush1.bf16.msra.mxu0 %v767
        %969 = vmatprep.subr.bf16.mxu0 %v770
        %970 = vmatpush1.bf16.msra.mxu0 %v769
        %971 = vmatprep.subr.bf16.mxu0 %v772
        %972 = vmatpush1.bf16.msra.mxu0 %v771
        %973 = vmatprep.subr.bf16.mxu0 %v774
        %974 = vmatpush1.bf16.msra.mxu0 %v773
        %975 = vmatprep.subr.bf16.mxu0 %v776
        %976 = vmatpush1.bf16.msra.mxu0 %v775
        %977 = vmatprep.subr.bf16.mxu0 %v778
        %978 = vmatpush1.bf16.msra.mxu0 %v777
        %979 = vmatprep.subr.bf16.mxu0 %v780
        %980 = vmatpush1.bf16.msra.mxu0 %v779
        %981 = vmatprep.subr.bf16.mxu0 %v782
        %982 = vmatpush1.bf16.msra.mxu0 %v781
        %983 = vmatprep.subr.bf16.mxu0 %v784
        %984 = vmatpush1.bf16.msra.mxu0 %v783
        %985 = vmatprep.subr.bf16.mxu0 %v786
        %986 = vmatpush1.bf16.msra.mxu0 %v785
        %987 = vmatprep.subr.bf16.mxu0 %v788
        %988 = vmatpush1.bf16.msra.mxu0 %v787
        %989 = vmatprep.subr.bf16.mxu0 %v790
        %990 = vmatpush1.bf16.msra.mxu0 %v789
        %991 = vmatprep.subr.bf16.mxu0 %v792
        %992 = vmatpush1.bf16.msra.mxu0 %v791
        %993 = vmatprep.subr.bf16.mxu0 %v794
        %994 = vmatpush1.bf16.msra.mxu0 %v793
        %995 = vmatprep.subr.bf16.mxu0 %v796
        %996 = vmatpush1.bf16.msra.mxu0 %v795
        %997 = vmatprep.subr.bf16.mxu0 %v798
        %998 = vmatpush1.bf16.msra.mxu0 %v797
        %999 = vmatprep.mubr.bf16.mxu0 %v357
        %1000 = vmatmul.mubr.bf16.gmra.mrb[0].mxu0 %v356
        %v1001 = vpop.f32.mrb[0].mxu0
        %v1002 = vadd.f32 %v466, %v1001
        %v1003 = vpop.f32.mrb[0].mxu0
        %v1004 = vadd.f32 %v470, %v1003
        %v1005 = vpop.f32.mrb[0].mxu0
        %v1006 = vadd.f32 %v466, %v1005
        %v1007 = vpop.f32.mrb[0].mxu0
        %v1008 = vadd.f32 %v470, %v1007
        %1009 = vdwg.mxu0
        %1010 = vmatprep.subr.bf16.mxu0 %v800
        %1011 = vmatpush1.bf16.msra.mxu0 %v799
        %1012 = vmatprep.subr.bf16.mxu0 %v802
        %1013 = vmatpush1.bf16.msra.mxu0 %v801
        %1014 = vmatprep.subr.bf16.mxu0 %v804
        %1015 = vmatpush1.bf16.msra.mxu0 %v803
        %1016 = vmatprep.subr.bf16.mxu0 %v806
        %1017 = vmatpush1.bf16.msra.mxu0 %v805
        %1018 = vmatprep.subr.bf16.mxu0 %v808
        %1019 = vmatpush1.bf16.msra.mxu0 %v807
        %1020 = vmatprep.subr.bf16.mxu0 %v810
        %1021 = vmatpush1.bf16.msra.mxu0 %v809
        %1022 = vmatprep.subr.bf16.mxu0 %v812
        %1023 = vmatpush1.bf16.msra.mxu0 %v811
        %1024 = vmatprep.subr.bf16.mxu0 %v814
        %1025 = vmatpush1.bf16.msra.mxu0 %v813
        %1026 = vmatprep.subr.bf16.mxu0 %v816
        %1027 = vmatpush1.bf16.msra.mxu0 %v815
        %1028 = vmatprep.subr.bf16.mxu0 %v818
        %1029 = vmatpush1.bf16.msra.mxu0 %v817
        %1030 = vmatprep.subr.bf16.mxu0 %v820
        %1031 = vmatpush1.bf16.msra.mxu0 %v819
        %1032 = vmatprep.subr.bf16.mxu0 %v822
        %1033 = vmatpush1.bf16.msra.mxu0 %v821
        %1034 = vmatprep.subr.bf16.mxu0 %v824
        %1035 = vmatpush1.bf16.msra.mxu0 %v823
        %1036 = vmatprep.subr.bf16.mxu0 %v826
        %1037 = vmatpush1.bf16.msra.mxu0 %v825
        %1038 = vmatprep.subr.bf16.mxu0 %v828
        %1039 = vmatpush1.bf16.msra.mxu0 %v827
        %1040 = vmatprep.subr.bf16.mxu0 %v830
        %1041 = vmatpush1.bf16.msra.mxu0 %v829
        %1042 = vmatprep.mubr.bf16.mxu0 %v359
        %1043 = vmatmul.mubr.bf16.gmra.mrb[0].mxu0 %v358
        %v1044 = vpop.f32.mrb[0].mxu0
        %v1045 = vadd.f32 %v1002, %v1044
        %v1046 = vpop.f32.mrb[0].mxu0
        %v1047 = vadd.f32 %v1004, %v1046
        %v1048 = vpop.f32.mrb[0].mxu0
        %v1049 = vadd.f32 %v1006, %v1048
        %v1050 = vpop.f32.mrb[0].mxu0
        %v1051 = vadd.f32 %v1008, %v1050
        %1052 = vdwg.mxu0
        %1053 = vmatprep.subr.bf16.mxu0 %v832
        %1054 = vmatpush1.bf16.msra.mxu0 %v831
        %1055 = vmatprep.subr.bf16.mxu0 %v834
        %1056 = vmatpush1.bf16.msra.mxu0 %v833
        %1057 = vmatprep.subr.bf16.mxu0 %v836
        %1058 = vmatpush1.bf16.msra.mxu0 %v835
        %1059 = vmatprep.subr.bf16.mxu0 %v838
        %1060 = vmatpush1.bf16.msra.mxu0 %v837
        %1061 = vmatprep.subr.bf16.mxu0 %v840
        %1062 = vmatpush1.bf16.msra.mxu0 %v839
        %1063 = vmatprep.subr.bf16.mxu0 %v842
        %1064 = vmatpush1.bf16.msra.mxu0 %v841
        %1065 = vmatprep.subr.bf16.mxu0 %v844
        %1066 = vmatpush1.bf16.msra.mxu0 %v843
        %1067 = vmatprep.subr.bf16.mxu0 %v846
        %1068 = vmatpush1.bf16.msra.mxu0 %v845
        %1069 = vmatprep.subr.bf16.mxu0 %v848
        %1070 = vmatpush1.bf16.msra.mxu0 %v847
        %1071 = vmatprep.subr.bf16.mxu0 %v850
        %1072 = vmatpush1.bf16.msra.mxu0 %v849
        %1073 = vmatprep.subr.bf16.mxu0 %v852
        %1074 = vmatpush1.bf16.msra.mxu0 %v851
        %1075 = vmatprep.subr.bf16.mxu0 %v854
        %1076 = vmatpush1.bf16.msra.mxu0 %v853
        %1077 = vmatprep.subr.bf16.mxu0 %v856
        %1078 = vmatpush1.bf16.msra.mxu0 %v855
        %1079 = vmatprep.subr.bf16.mxu0 %v858
        %1080 = vmatpush1.bf16.msra.mxu0 %v857
        %1081 = vmatprep.subr.bf16.mxu0 %v860
        %1082 = vmatpush1.bf16.msra.mxu0 %v859
        %1083 = vmatprep.subr.bf16.mxu0 %v862
        %1084 = vmatpush1.bf16.msra.mxu0 %v861
        %1085 = vmatprep.mubr.bf16.mxu0 %v361
        %1086 = vmatmul.mubr.bf16.gmra.mrb[0].mxu0 %v360
        %v1087 = vpop.f32.mrb[0].mxu0
        %v1088 = vadd.f32 %v1045, %v1087
        %v1089 = vpop.f32.mrb[0].mxu0
        %v1090 = vadd.f32 %v1047, %v1089
        %v1091 = vpop.f32.mrb[0].mxu0
        %v1092 = vadd.f32 %v1049, %v1091
        %v1093 = vpop.f32.mrb[0].mxu0
        %v1094 = vadd.f32 %v1051, %v1093
        %1095 = vdwg.mxu0
        %1096 = vmatprep.subr.bf16.mxu0 %v864
        %1097 = vmatpush1.bf16.msra.mxu0 %v863
        %1098 = vmatprep.subr.bf16.mxu0 0
        %1099 = vmatpush1.bf16.msra.mxu0 0
        %1100 = vmatprep.subr.bf16.mxu0 0
        %1101 = vmatpush1.bf16.msra.mxu0 0
        %1102 = vmatprep.subr.bf16.mxu0 0
        %1103 = vmatpush1.bf16.msra.mxu0 0
        %1104 = vmatprep.subr.bf16.mxu0 0
        %1105 = vmatpush1.bf16.msra.mxu0 0
        %1106 = vmatprep.subr.bf16.mxu0 0
        %1107 = vmatpush1.bf16.msra.mxu0 0
        %1108 = vmatprep.subr.bf16.mxu0 0
        %1109 = vmatpush1.bf16.msra.mxu0 0
        %1110 = vmatprep.subr.bf16.mxu0 0
        %1111 = vmatpush1.bf16.msra.mxu0 0
        %1112 = vmatprep.subr.bf16.mxu0 0
        %1113 = vmatpush1.bf16.msra.mxu0 0
        %1114 = vmatprep.subr.bf16.mxu0 0
        %1115 = vmatpush1.bf16.msra.mxu0 0
        %1116 = vmatprep.subr.bf16.mxu0 0
        %1117 = vmatpush1.bf16.msra.mxu0 0
        %1118 = vmatprep.subr.bf16.mxu0 0
        %1119 = vmatpush1.bf16.msra.mxu0 0
        %1120 = vmatprep.subr.bf16.mxu0 0
        %1121 = vmatpush1.bf16.msra.mxu0 0
        %1122 = vmatprep.subr.bf16.mxu0 0
        %1123 = vmatpush1.bf16.msra.mxu0 0
        %1124 = vmatprep.subr.bf16.mxu0 0
        %1125 = vmatpush1.bf16.msra.mxu0 0
        %1126 = vmatprep.subr.bf16.mxu0 0
        %1127 = vmatpush1.bf16.msra.mxu0 0
        %1128 = vmatprep.mubr.bf16.mxu0 0
        %1129 = vmatmul.mubr.bf16.gmra.mrb[0].mxu0 %v965
        %v1130 = vpop.f32.mrb[0].mxu0
        %v1131 = vadd.f32 %v1088, %v1130
        %v1132 = vpop.f32.mrb[0].mxu0
        %v1133 = vadd.f32 %v1090, %v1132
        %v1134 = vpop.f32.mrb[0].mxu0
        %v1135 = vadd.f32 %v1092, %v1134
        %v1136 = vpop.f32.mrb[0].mxu0
        %v1137 = vadd.f32 %v1094, %v1136
        %1138 = vdwg.mxu0
        %v1139 = vmax.f32 %v1131, 0.0
        %v1140 = vmax.f32 %v1133, 0.0
        %v1141 = vmax.f32 %v1135, 0.0
        %v1142 = vmax.f32 %v1137, 0.0
        %v1143 = vpack.c.bf16 %v1141, %v1139
        %v1144 = vpack.c.bf16 %v1142, %v1140
        %v1145 = vld [vmem:[#allocation6] sm:$0xf]
        %v1146 = vld [vmem:[#allocation6 + $0x4] sm:$0xf]
        %v1147 = vld [vmem:[#allocation6 + $0x8] sm:$0xf]
        %v1148 = vld [vmem:[#allocation6 + $0xc] sm:$0xf]
        %v1149 = vld [vmem:[#allocation6 + $0x10] sm:$0xf]
        %v1150 = vld [vmem:[#allocation6 + $0x14] sm:$0xf]
        %v1151 = vld [vmem:[#allocation6 + $0x18] sm:$0xf]
        %v1152 = vld [vmem:[#allocation6 + $0x1c] sm:$0xf]
        %v1153 = vld [vmem:[#allocation6 + $0x20] sm:$0xf]
        %v1154 = vld [vmem:[#allocation6 + $0x24] sm:$0xf]
        %v1155 = vld [vmem:[#allocation6 + $0x28] sm:$0xf]
        %v1156 = vld [vmem:[#allocation6 + $0x2c] sm:$0xf]
        %v1157 = vld [vmem:[#allocation6 + $0x30] sm:$0xf]
        %v1158 = vld [vmem:[#allocation6 + $0x34] sm:$0xf]
        %v1159 = vld [vmem:[#allocation6 + $0x38] sm:$0xf]
        %v1160 = vld [vmem:[#allocation6 + $0x3c] sm:$0xf]
        %v1161 = vld [vmem:[#allocation6 + $0x40] sm:$0xf]
        %v1162 = vld [vmem:[#allocation6 + $0x44] sm:$0xf]
        %v1163 = vld [vmem:[#allocation6 + $0x48] sm:$0xf]
        %v1164 = vld [vmem:[#allocation6 + $0x4c] sm:$0xf]
        %v1165 = vld [vmem:[#allocation6 + $0x50] sm:$0xf]
        %v1166 = vld [vmem:[#allocation6 + $0x54] sm:$0xf]
        %v1167 = vld [vmem:[#allocation6 + $0x58] sm:$0xf]
        %v1168 = vld [vmem:[#allocation6 + $0x5c] sm:$0xf]
        %v1169 = vld [vmem:[#allocation6 + $0x60] sm:$0xf]
        %v1170 = vld [vmem:[#allocation6 + $0x64] sm:$0xf]
        %v1171 = vld [vmem:[#allocation6 + $0x68] sm:$0xf]
        %v1172 = vld [vmem:[#allocation6 + $0x6c] sm:$0xf]
        %v1173 = vld [vmem:[#allocation6 + $0x70] sm:$0xf]
        %v1174 = vld [vmem:[#allocation6 + $0x74] sm:$0xf]
        %v1175 = vld [vmem:[#allocation6 + $0x78] sm:$0xf]
        %v1176 = vld [vmem:[#allocation6 + $0x7c] sm:$0xf]
        %v1177 = vld [vmem:[%s4] sm:$0x1]
        %v1179 = vlaneseq
        %v1180 = vshrl.u32 %v1179, 7
        %v1181 = vsub.s32 0, %v1180
        %v1182 = vrot.slane %v1177, %v1181
        %v1216 = vunpack.c.l.b16 %v1145
        %v1217 = vunpack.c.l.b16 %v1146
        %v1218 = vunpack.c.l.b16 %v1147
        %v1219 = vunpack.c.l.b16 %v1148
        %v1220 = vunpack.c.l.b16 %v1149
        %v1221 = vunpack.c.l.b16 %v1150
        %v1222 = vunpack.c.l.b16 %v1151
        %v1223 = vunpack.c.l.b16 %v1152
        %v1224 = vunpack.c.l.b16 %v1153
        %v1225 = vunpack.c.l.b16 %v1154
        %v1226 = vunpack.c.l.b16 %v1155
        %v1227 = vunpack.c.l.b16 %v1156
        %v1228 = vunpack.c.l.b16 %v1157
        %v1229 = vunpack.c.l.b16 %v1158
        %v1230 = vunpack.c.l.b16 %v1159
        %v1231 = vunpack.c.l.b16 %v1160
        %v1232 = vunpack.c.l.b16 %v1161
        %v1233 = vunpack.c.l.b16 %v1162
        %v1234 = vunpack.c.l.b16 %v1163
        %v1235 = vunpack.c.l.b16 %v1164
        %v1236 = vunpack.c.l.b16 %v1165
        %v1237 = vunpack.c.l.b16 %v1166
        %v1238 = vunpack.c.l.b16 %v1167
        %v1239 = vunpack.c.l.b16 %v1168
        %v1240 = vunpack.c.l.b16 %v1169
        %v1241 = vunpack.c.l.b16 %v1170
        %v1242 = vunpack.c.l.b16 %v1171
        %v1243 = vunpack.c.l.b16 %v1172
        %v1244 = vunpack.c.l.b16 %v1173
        %v1245 = vunpack.c.l.b16 %v1174
        %v1246 = vunpack.c.l.b16 %v1175
        %v1247 = vunpack.c.l.b16 %v1176
        %v1248 = vpack.c.b16 %v1217, %v1216
        %v1249 = vpack.c.b16 %v1219, %v1218
        %v1250 = vpack.c.b16 %v1221, %v1220
        %v1251 = vpack.c.b16 %v1223, %v1222
        %v1252 = vpack.c.b16 %v1225, %v1224
        %v1253 = vpack.c.b16 %v1227, %v1226
        %v1254 = vpack.c.b16 %v1229, %v1228
        %v1255 = vpack.c.b16 %v1231, %v1230
        %v1256 = vpack.c.b16 %v1233, %v1232
        %v1257 = vpack.c.b16 %v1235, %v1234
        %v1258 = vpack.c.b16 %v1237, %v1236
        %v1259 = vpack.c.b16 %v1239, %v1238
        %v1260 = vpack.c.b16 %v1241, %v1240
        %v1261 = vpack.c.b16 %v1243, %v1242
        %v1262 = vpack.c.b16 %v1245, %v1244
        %v1263 = vpack.c.b16 %v1247, %v1246
        %1280 = vmatprep.subr.bf16.mxu0 0
        %1281 = vmatpush1.bf16.msra.mxu0 %v1248
        %1282 = vmatprep.subr.bf16.mxu0 0
        %1283 = vmatpush1.bf16.msra.mxu0 %v1249
        %1284 = vmatprep.subr.bf16.mxu0 0
        %1285 = vmatpush1.bf16.msra.mxu0 %v1250
        %1286 = vmatprep.subr.bf16.mxu0 0
        %1287 = vmatpush1.bf16.msra.mxu0 %v1251
        %1288 = vmatprep.subr.bf16.mxu0 0
        %1289 = vmatpush1.bf16.msra.mxu0 %v1252
        %1290 = vmatprep.subr.bf16.mxu0 0
        %1291 = vmatpush1.bf16.msra.mxu0 %v1253
        %1292 = vmatprep.subr.bf16.mxu0 0
        %1293 = vmatpush1.bf16.msra.mxu0 %v1254
        %1294 = vmatprep.subr.bf16.mxu0 0
        %1295 = vmatpush1.bf16.msra.mxu0 %v1255
        %1296 = vmatprep.subr.bf16.mxu0 0
        %1297 = vmatpush1.bf16.msra.mxu0 %v1256
        %1298 = vmatprep.subr.bf16.mxu0 0
        %1299 = vmatpush1.bf16.msra.mxu0 %v1257
        %1300 = vmatprep.subr.bf16.mxu0 0
        %1301 = vmatpush1.bf16.msra.mxu0 %v1258
        %1302 = vmatprep.subr.bf16.mxu0 0
        %1303 = vmatpush1.bf16.msra.mxu0 %v1259
        %1304 = vmatprep.subr.bf16.mxu0 0
        %1305 = vmatpush1.bf16.msra.mxu0 %v1260
        %1306 = vmatprep.subr.bf16.mxu0 0
        %1307 = vmatpush1.bf16.msra.mxu0 %v1261
        %1308 = vmatprep.subr.bf16.mxu0 0
        %1309 = vmatpush1.bf16.msra.mxu0 %v1262
        %1310 = vmatprep.subr.bf16.mxu0 0
        %1311 = vmatpush1.bf16.msra.mxu0 %v1263
        %1312 = vmatprep.mubr.bf16.mxu0 %v1144
        %1313 = vmatmul.mubr.bf16.gmra.mrb[0].mxu0 %v1143
        %v1314 = vpop.f32.mrb[0].mxu0
        %v1315 = vadd.f32 %v1182, %v1314
        %v1316 = vpop.f32.mrb[0].mxu0
        %v1317 = vpop.f32.mrb[0].mxu0
        %v1318 = vadd.f32 %v1182, %v1317
        %v1319 = vpop.f32.mrb[0].mxu0
        %1320 = vdwg.mxu0
        %v1321 = vmax.f32 %v1315, 0.0
        %v1322 = vmax.f32 %v1318, 0.0
        %v1323 = vpack.c.bf16 %v1322, %v1321
        %v1324 = vld [vmem:[%s5] sm:$0xf]
        %v1325 = vld [vmem:[%s5 + $0x4] sm:$0xf]
        %v1326 = vld [vmem:[%s5 + $0x8] sm:$0xf]
        %v1327 = vld [vmem:[%s5 + $0xc] sm:$0xf]
        %v1328 = vld [vmem:[%s5 + $0x10] sm:$0xf]
        %v1329 = vld [vmem:[%s5 + $0x14] sm:$0xf]
        %v1330 = vld [vmem:[%s5 + $0x18] sm:$0xf]
        %v1331 = vld [vmem:[%s5 + $0x1c] sm:$0xf]
        %v1332 = vld [vmem:[%s5 + $0x20] sm:$0xf]
        %v1333 = vld [vmem:[%s5 + $0x24] sm:$0xf]
        %v1334 = vld [vmem:[%s5 + $0x28] sm:$0xf]
        %v1335 = vld [vmem:[%s5 + $0x2c] sm:$0xf]
        %v1336 = vld [vmem:[%s5 + $0x30] sm:$0xf]
        %v1337 = vld [vmem:[%s5 + $0x34] sm:$0xf]
        %v1338 = vld [vmem:[%s5 + $0x38] sm:$0xf]
        %v1339 = vld [vmem:[%s5 + $0x3c] sm:$0xf]
        %v1340 = vld [vmem:[%s6] sm:$0x1]
        %v1342 = vlaneseq
        %v1343 = vshrl.u32 %v1342, 7
        %v1344 = vsub.s32 0, %v1343
        %v1345 = vrot.slane %v1340, %v1344
        %v1363 = vunpack.c.l.b16 %v1324
        %v1364 = vunpack.c.l.b16 %v1325
        %v1365 = vunpack.c.l.b16 %v1326
        %v1366 = vunpack.c.l.b16 %v1327
        %v1367 = vunpack.c.l.b16 %v1328
        %v1368 = vunpack.c.l.b16 %v1329
        %v1369 = vunpack.c.l.b16 %v1330
        %v1370 = vunpack.c.l.b16 %v1331
        %v1371 = vunpack.c.l.b16 %v1332
        %v1372 = vunpack.c.l.b16 %v1333
        %v1373 = vunpack.c.l.b16 %v1334
        %v1374 = vunpack.c.l.b16 %v1335
        %v1375 = vunpack.c.l.b16 %v1336
        %v1376 = vunpack.c.l.b16 %v1337
        %v1377 = vunpack.c.l.b16 %v1338
        %v1378 = vunpack.c.l.b16 %v1339
        %v1379 = vpack.c.b16 %v1364, %v1363
        %v1380 = vpack.c.b16 %v1366, %v1365
        %v1381 = vpack.c.b16 %v1368, %v1367
        %v1382 = vpack.c.b16 %v1370, %v1369
        %v1383 = vpack.c.b16 %v1372, %v1371
        %v1384 = vpack.c.b16 %v1374, %v1373
        %v1385 = vpack.c.b16 %v1376, %v1375
        %v1386 = vpack.c.b16 %v1378, %v1377
        %1395 = vmatprep.subr.bf16.mxu0 0
        %1396 = vmatpush1.bf16.msra.mxu0 %v1379
        %1397 = vmatprep.subr.bf16.mxu0 0
        %1398 = vmatpush1.bf16.msra.mxu0 %v1380
        %1399 = vmatprep.subr.bf16.mxu0 0
        %1400 = vmatpush1.bf16.msra.mxu0 %v1381
        %1401 = vmatprep.subr.bf16.mxu0 0
        %1402 = vmatpush1.bf16.msra.mxu0 %v1382
        %1403 = vmatprep.subr.bf16.mxu0 0
        %1404 = vmatpush1.bf16.msra.mxu0 %v1383
        %1405 = vmatprep.subr.bf16.mxu0 0
        %1406 = vmatpush1.bf16.msra.mxu0 %v1384
        %1407 = vmatprep.subr.bf16.mxu0 0
        %1408 = vmatpush1.bf16.msra.mxu0 %v1385
        %1409 = vmatprep.subr.bf16.mxu0 0
        %1410 = vmatpush1.bf16.msra.mxu0 %v1386
        %1411 = vmatprep.subr.bf16.mxu0 0
        %1412 = vmatpush1.bf16.msra.mxu0 0
        %1413 = vmatprep.subr.bf16.mxu0 0
        %1414 = vmatpush1.bf16.msra.mxu0 0
        %1415 = vmatprep.subr.bf16.mxu0 0
        %1416 = vmatpush1.bf16.msra.mxu0 0
        %1417 = vmatprep.subr.bf16.mxu0 0
        %1418 = vmatpush1.bf16.msra.mxu0 0
        %1419 = vmatprep.subr.bf16.mxu0 0
        %1420 = vmatpush1.bf16.msra.mxu0 0
        %1421 = vmatprep.subr.bf16.mxu0 0
        %1422 = vmatpush1.bf16.msra.mxu0 0
        %1423 = vmatprep.subr.bf16.mxu0 0
        %1424 = vmatpush1.bf16.msra.mxu0 0
        %1425 = vmatprep.subr.bf16.mxu0 0
        %1426 = vmatpush1.bf16.msra.mxu0 0
        %1427 = vmatprep.mubr.bf16.mxu0 0
        %1428 = vmatmul.mubr.bf16.gmra.mrb[0].mxu0 %v1323
        %v1429 = vpop.f32.mrb[0].mxu0
        %v1430 = vadd.f32 %v1345, %v1429
        %v1431 = vpop.f32.mrb[0].mxu0
        %v1432 = vpop.f32.mrb[0].mxu0
        %v1433 = vadd.f32 %v1345, %v1432
        %v1434 = vpop.f32.mrb[0].mxu0
        %1435 = vdwg.mxu0
        %vm1436 = vcmask 80896
        %v1437 = vsel %vm1436, %v1430, -inf
        %1438 = vmax.xlane.f32.xlu0 %v1437
        %v1439 = vpop.xlane.xlu0 %1438
        %v1440 = vsel %vm1436, %v1433, -inf
        %1441 = vmax.xlane.f32.xlu0 %v1440
        %v1442 = vpop.xlane.xlu0 %1441
        %v1443 = vsub.f32 %v1430, %v1439
        %v1444 = vsub.f32 %v1433, %v1442
        %v1445 = vmul.f32 %v1443, 1.442695
        %v1446 = vpow.pop %v1445
        %v1447 = vmul.f32 %v1444, 1.442695
        %v1448 = vpow.pop %v1447
        %v1449 = vsel %vm1436, %v1446, 0.0
        %1450 = vadd.xlane.f32.xlu0 %v1449
        %v1451 = vpop.xlane.xlu0 %1450
        %v1452 = vsel %vm1436, %v1448, 0.0
        %1453 = vadd.xlane.f32.xlu0 %v1452
        %v1454 = vpop.xlane.xlu0 %1453
        %v1455 = vrcp.pop %v1451
        %v1456 = vmul.f32 %v1446, %v1455
        %v1457 = vrcp.pop %v1454
        %v1458 = vmul.f32 %v1448, %v1457
        %1459 = vst.msk [vmem:[%s329] sm:$0xff] %vm1436, %v1456
        %1460 = vst.msk [vmem:[%s329 + $0x8] sm:$0xff] %vm1436, %v1458
        %s1461 = sand.u32 %s182, 1
        %s1462 = sand.u32 %s182, 1
        %s1463 = smul.addr %s1462, 16
        %s1464 = scalar_lea.vmem [#allocation7], %s1463
        // Predicated region
        $region61: #{_mlp_pallas.1} parent=47 // pred_check
          %p1465 = pneg %p192
        $region62: #{_mlp_pallas.1} parent=47 // pred_check_branch
          %1467 = sbr.rel (%p1465) target = $region64
        $region63: #{_mlp_pallas.1} parent=47 // pred_region
          %s1468 = smul.u32 2, %s22
          %s1469 = ssub.s32 5, %s1468
          %p1470 = scmp.lt.s32.totalorder %s1469, 2
          %s1471 = scalar_select %p1470, %s1469, 2
          %s1472 = smul.u32 128, %s1471
          %p1473 = scmp.ne.s32.totalorder 0, %s1472
          %s1474 = smul.addr %s1468, 8
          %s1475 = scalar_lea.vmem %s7, %s1474
          // Predicated region
          $region65: #{_mlp_pallas.1} parent=63 // pred_check
            %p1476 = pneg %p1473
          $region66: #{_mlp_pallas.1} parent=63 // pred_check_branch
            %1478 = sbr.rel (%p1476) target = $region68
          $region67: #{_mlp_pallas.1} parent=63 // pred_region
            // Predicated region
            $region69: #{_mlp_pallas.1} parent=67 // pred_check
              _
            $region70: #{_mlp_pallas.1} parent=67 // pred_check_branch
              %1480 = sbr.rel (0) target = $region72
            $region71: #{_mlp_pallas.1} parent=67 // pred_region
              // Predicated region
              $region91: #{_mlp_pallas.1} parent=71 // pred_check
                _
              $region92: #{_mlp_pallas.1} parent=71 // pred_check_branch
                %1531 = sbr.rel (0) target = $region94
              $region93: #{_mlp_pallas.1} parent=71 // pred_region
                %s1532 = sshrl.u32 %s1471, 1
                // While loop
                $region95: #{_mlp_pallas.1} parent=93 // loop_pre_header
                  _
                $region96: #{_mlp_pallas.1} parent=93 // loop_header
                  %s1534 = sphi 0, %s1536
                  %p1535 = scmp.ge.s32.totalorder %s1534, %s1532
                  %s1539 = sphi 0, %s1548
                  %s1540 = sphi %s1464, %s1551
                  %s1541 = sphi %s1475, %s1552
                $region97: #{_mlp_pallas.1} parent=93 // loop_header_branch
                  %1538 = sbr.rel (%p1535) target = $region101
                $region98: #{_mlp_pallas.1} parent=93 // loop_body
                  %v1542 = vld [vmem:[%s1540] sm:$0xff]
                  %1543 = vst [vmem:[%s1541] sm:$0xff] %v1542
                  %v1544 = vld [vmem:[%s1540 + $0x8] sm:$0xff]
                  %1545 = vst [vmem:[%s1541 + $0x8] sm:$0xff] %v1544
                  %s1546 = sadd.s32 1, %s1539
                  %p1547 = scmp.ge.s32.totalorder %s1546, %s1532
                  %s1548 = scalar_select %p1547, 0, %s1546
                  %s1549 = smul.u32 %s1548, 16
                  %s1550 = smul.u32 %s1548, 16
                  %s1551 = scalar_lea.vmem %s1464, %s1549 [#allocation7]
                  %s1552 = scalar_lea.vmem %s1475, %s1550
                $region99: #{_mlp_pallas.1} parent=93 // loop_footer
                  %s1536 = sadd.s32 %s1534, 1
                $region100: #{_mlp_pallas.1} parent=93 // loop_footer_branch
                  %1533 = sbr.rel target = $region96
                $region101: #{_mlp_pallas.1} parent=93 // loop_exit
                  _
                %s1553 = sshrl.u32 %s1471, 1
                %s1554 = sand.u32 %s1471, 1
                %s1555 = smul.u32 %s1553, 2
                %s1556 = smul.u32 8, %s1555
                %s1557 = scalar_lea.vmem %s1464, %s1556 [#allocation7]
                %s1558 = smul.u32 8, %s1555
                %s1559 = scalar_lea.vmem %s1475, %s1558
                // While loop
                $region102: #{_mlp_pallas.1} parent=93 // loop_pre_header
                  _
                $region103: #{_mlp_pallas.1} parent=93 // loop_header
                  %s1561 = sphi 0, %s1563
                  %p1562 = scmp.ge.s32.totalorder %s1561, %s1554
                  %s1566 = sphi 0, %s1573
                  %s1567 = sphi %s1557, %s1576
                  %s1568 = sphi %s1559, %s1577
                $region104: #{_mlp_pallas.1} parent=93 // loop_header_branch
                  %1565 = sbr.rel (%p1562) target = $region108
                $region105: #{_mlp_pallas.1} parent=93 // loop_body
                  %v1569 = vld [vmem:[%s1567] sm:$0xff]
                  %1570 = vst [vmem:[%s1568] sm:$0xff] %v1569
                  %s1571 = sadd.s32 1, %s1566
                  %p1572 = scmp.ge.s32.totalorder %s1571, %s1554
                  %s1573 = scalar_select %p1572, 0, %s1571
                  %s1574 = smul.u32 %s1573, 8
                  %s1575 = smul.u32 %s1573, 8
                  %s1576 = scalar_lea.vmem %s1557, %s1574 [#allocation7]
                  %s1577 = scalar_lea.vmem %s1559, %s1575
                $region106: #{_mlp_pallas.1} parent=93 // loop_footer
                  %s1563 = sadd.s32 %s1561, 1
                $region107: #{_mlp_pallas.1} parent=93 // loop_footer_branch
                  %1560 = sbr.rel target = $region103
                $region108: #{_mlp_pallas.1} parent=93 // loop_exit
                  _
              $region94: #{_mlp_pallas.1} parent=71 // pred_fallthru
                _
              // Predicated region
              $region109: #{_mlp_pallas.1} parent=71 // pred_check
                _
              $region110: #{_mlp_pallas.1} parent=71 // pred_check_branch
                %1579 = sbr.rel target = $region112
              $region111: #{_mlp_pallas.1} parent=71 // pred_region
                _
              $region112: #{_mlp_pallas.1} parent=71 // pred_fallthru
                _
            $region72: #{_mlp_pallas.1} parent=67 // pred_fallthru
              _
            // Predicated region
            $region73: #{_mlp_pallas.1} parent=67 // pred_check
              _
            $region74: #{_mlp_pallas.1} parent=67 // pred_check_branch
              %1482 = sbr.rel target = $region76
            $region75: #{_mlp_pallas.1} parent=67 // pred_region
              %s1484 = sshrl.u32 %s1471, 1
              // While loop
              $region77: #{_mlp_pallas.1} parent=75 // loop_pre_header
                _
              $region78: #{_mlp_pallas.1} parent=75 // loop_header
                %s1486 = sphi 0, %s1488
                %p1487 = scmp.ge.s32.totalorder %s1486, %s1484
                %s1491 = sphi 0, %s1500
                %s1492 = sphi %s1464, %s1503
                %s1493 = sphi %s1475, %s1504
              $region79: #{_mlp_pallas.1} parent=75 // loop_header_branch
                %1490 = sbr.rel (%p1487) target = $region83
              $region80: #{_mlp_pallas.1} parent=75 // loop_body
                %v1494 = vld [vmem:[%s1492] sm:$0xff]
                %1495 = vst [vmem:[%s1493] sm:$0xff] %v1494
                %v1496 = vld [vmem:[%s1492 + $0x8] sm:$0xff]
                %1497 = vst [vmem:[%s1493 + $0x8] sm:$0xff] %v1496
                %s1498 = sadd.s32 1, %s1491
                %p1499 = scmp.ge.s32.totalorder %s1498, %s1484
                %s1500 = scalar_select %p1499, 0, %s1498
                %s1501 = smul.u32 %s1500, 16
                %s1502 = smul.u32 %s1500, 16
                %s1503 = scalar_lea.vmem %s1464, %s1501 [#allocation7]
                %s1504 = scalar_lea.vmem %s1475, %s1502
              $region81: #{_mlp_pallas.1} parent=75 // loop_footer
                %s1488 = sadd.s32 %s1486, 1
              $region82: #{_mlp_pallas.1} parent=75 // loop_footer_branch
                %1485 = sbr.rel target = $region78
              $region83: #{_mlp_pallas.1} parent=75 // loop_exit
                _
              %s1505 = sshrl.u32 %s1471, 1
              %s1506 = sand.u32 %s1471, 1
              %s1507 = smul.u32 %s1505, 2
              %s1508 = smul.u32 8, %s1507
              %s1509 = scalar_lea.vmem %s1464, %s1508 [#allocation7]
              %s1510 = smul.u32 8, %s1507
              %s1511 = scalar_lea.vmem %s1475, %s1510
              // While loop
              $region84: #{_mlp_pallas.1} parent=75 // loop_pre_header
                _
              $region85: #{_mlp_pallas.1} parent=75 // loop_header
                %s1513 = sphi 0, %s1515
                %p1514 = scmp.ge.s32.totalorder %s1513, %s1506
                %s1518 = sphi 0, %s1525
                %s1519 = sphi %s1509, %s1528
                %s1520 = sphi %s1511, %s1529
              $region86: #{_mlp_pallas.1} parent=75 // loop_header_branch
                %1517 = sbr.rel (%p1514) target = $region90
              $region87: #{_mlp_pallas.1} parent=75 // loop_body
                %v1521 = vld [vmem:[%s1519] sm:$0xff]
                %1522 = vst [vmem:[%s1520] sm:$0xff] %v1521
                %s1523 = sadd.s32 1, %s1518
                %p1524 = scmp.ge.s32.totalorder %s1523, %s1506
                %s1525 = scalar_select %p1524, 0, %s1523
                %s1526 = smul.u32 %s1525, 8
                %s1527 = smul.u32 %s1525, 8
                %s1528 = scalar_lea.vmem %s1509, %s1526 [#allocation7]
                %s1529 = scalar_lea.vmem %s1511, %s1527
              $region88: #{_mlp_pallas.1} parent=75 // loop_footer
                %s1515 = sadd.s32 %s1513, 1
              $region89: #{_mlp_pallas.1} parent=75 // loop_footer_branch
                %1512 = sbr.rel target = $region85
              $region90: #{_mlp_pallas.1} parent=75 // loop_exit
                _
            $region76: #{_mlp_pallas.1} parent=67 // pred_fallthru
              _
          $region68: #{_mlp_pallas.1} parent=63 // pred_fallthru
            _
          %1580 = vnop
        $region64: #{_mlp_pallas.1} parent=47 // pred_fallthru
          _
      $region48: #{_mlp_pallas.1} parent=5 // pred_fallthru
        _
      %p1581 = scmp.le.s32.totalorder 2, %s17
      // Predicated region
      $region113: #{_mlp_pallas.1} parent=5 // pred_check
        %p1582 = pneg %p1581
      $region114: #{_mlp_pallas.1} parent=5 // pred_check_branch
        %1584 = sbr.rel (%p1582) target = $region116
      $region115: #{_mlp_pallas.1} parent=5 // pred_region
        %s1585 = ssub.s32 %s17, 2
        // Predicated region
        $region117: #{_mlp_pallas.1} parent=115 // pred_check
          %p1586 = pneg %p198
        $region118: #{_mlp_pallas.1} parent=115 // pred_check_branch
          %1588 = sbr.rel (%p1586) target = $region120
        $region119: #{_mlp_pallas.1} parent=115 // pred_region
          %s1589 = sand.u32 %s183, 1
          %s1590 = sand.u32 %s183, 1
          %s1591 = smul.addr %s1590, 16
          %s1592 = scalar_lea.vmem [#allocation7], %s1591
        $region120: #{_mlp_pallas.1} parent=115 // pred_fallthru
          _
      $region116: #{_mlp_pallas.1} parent=5 // pred_fallthru
        _
    $region6: #{_mlp_pallas.1} parent=1 // loop_footer
      %s21 = sadd.s32 1, %s17
    $region7: #{_mlp_pallas.1} parent=1 // loop_footer_branch
      %16 = sbr.rel target = $region3
    $region8: #{_mlp_pallas.1} parent=1 // loop_exit
      _
    %1593 = vsyncpa [#allocation3], 1
    %s1594 = scalar_lea.sflag [#allocation3], 1
    %1595 = vsyncpa %s1594, 1
    %1596 = vsyncpa [#allocation5], 1

</llo_original>
